<compile_context>
chip_gen: v7x
topology: tpu7x:2x2x1
jax: 0.10.0
libtpu: 0.0.40
codegen_flags: <defaults>
</compile_context>

<pallas_src>
import jax
import jax.numpy as jnp
from jax.experimental import pallas as pl
from jax.experimental.pallas import tpu as pltpu


def _round_up(x, m):
    return ((x + m - 1) // m) * m


def encoder_head_kernel(feat_ref, w_fc_ref, gamma_ref, beta_ref,
                        w_heads_ref, b_heads_ref, out_ref, acc_ref):
    k = pl.program_id(0)

    @pl.when(k == 0)
    def _():
        acc_ref[...] = jnp.zeros_like(acc_ref)

    # fc: Linear(in_features -> 512), K-split partial product.
    # bf16 operands, f32 accumulation on the MXU.  (b_fc is omitted: it is
    # exactly cancelled by the batch-statistic BatchNorm that follows.)
    acc_ref[...] += jnp.dot(feat_ref[...], w_fc_ref[...],
                            preferred_element_type=jnp.float32)

    @pl.when(k == pl.num_programs(0) - 1)
    def _():
        h = acc_ref[...]                                         # (B, 512) f32

        # BatchNorm1d(512), training-mode batch statistics, eps=1e-5.
        # Two-pass variance (E[(h-mean)^2]) for numerical safety; h is tiny
        # and VMEM-resident so the second pass is essentially free.
        inv_n = 1.0 / h.shape[0]
        mean = jnp.sum(h, axis=0, keepdims=True) * inv_n
        centered = h - mean
        var = jnp.sum(centered * centered, axis=0, keepdims=True) * inv_n
        inv_std = jax.lax.rsqrt(var + 1e-5)
        h = centered * (inv_std * gamma_ref[...]) + beta_ref[...]

        # LeakyReLU(negative_slope=0.01)
        h = jnp.where(h >= 0, h, 0.01 * h)

        # Fused mu|log_var heads: one matmul into a lane-dense (B, 128) slab.
        out = jnp.dot(h.astype(jnp.bfloat16), w_heads_ref[...],
                      preferred_element_type=jnp.float32) + b_heads_ref[...]
        out_ref[...] = out.astype(out_ref.dtype)


def encoder_head(feat, params, latent_dim, *, tk=1024):
    """feat: (B, in_features) f32. Returns (mu, log_var), each (B, latent_dim)."""
    B, F = feat.shape
    # Batch-statistic BatchNorm needs at least 2 samples (var=0 at B=1).
    assert B >= 2, "Encoder head uses batch-stat BatchNorm; B must be >= 2"
    assert F % tk == 0, "in_features must be divisible by the K tile"
    padded_out = params["w_heads"].shape[1]

    # Feed feat as bf16: halves its HBM traffic and removes the in-kernel cast.
    feat_bf16 = feat.astype(jnp.bfloat16)

    fused = pl.pallas_call(
        encoder_head_kernel,
        out_shape=jax.ShapeDtypeStruct((B, padded_out), jnp.float32),
        grid_spec=pltpu.PrefetchScalarGridSpec(
            num_scalar_prefetch=0,
            grid=(F // tk,),
            in_specs=[
                pl.BlockSpec((B, tk), lambda k: (0, k)),          # feat K-tile
                pl.BlockSpec((tk, 512), lambda k: (k, 0)),        # w_fc K-tile
                pl.BlockSpec((1, 512), lambda k: (0, 0)),         # gamma (resident)
                pl.BlockSpec((1, 512), lambda k: (0, 0)),         # beta  (resident)
                pl.BlockSpec((512, padded_out), lambda k: (0, 0)),  # w_heads (resident)
                pl.BlockSpec((1, padded_out), lambda k: (0, 0)),  # b_heads (resident)
            ],
            out_specs=pl.BlockSpec((B, padded_out), lambda k: (0, 0)),
            scratch_shapes=[pltpu.VMEM((B, 512), jnp.float32)],   # fc accumulator
        ),
        compiler_params=pltpu.CompilerParams(
            dimension_semantics=("arbitrary",),                   # K is a reduction
            vmem_limit_bytes=32 * 1024 * 1024,
        ),
    )(feat_bf16, params["w_fc"], params["gamma"], params["beta"],
      params["w_heads"], params["b_heads"])

    mu = fused[:, :latent_dim]
    log_var = fused[:, latent_dim:2 * latent_dim]
    return mu, log_var


def init_params(key, in_features, latent_dim):
    """Deterministic init mimicking nn.Linear default (uniform +/- 1/sqrt(fan_in)).

    Weights are stored bf16 (the kernel computes with bf16 operands / f32 acc);
    biases and BN params stay f32.  The mu / log_var head weights are fused and
    zero-padded to a 128-lane-aligned output width.  b_fc is kept here only for
    the pure-JAX reference; the kernel does not consume it (BN cancels it).
    """
    ks = jax.random.split(key, 6)

    def linear(kw, kb, fan_in, fan_out):
        bound = 1.0 / (fan_in ** 0.5)
        w = jax.random.uniform(kw, (fan_in, fan_out), jnp.float32, -bound, bound)
        b = jax.random.uniform(kb, (1, fan_out), jnp.float32, -bound, bound)
        return w, b

    w_fc, b_fc = linear(ks[0], ks[1], in_features, 512)
    w_mu, b_mu = linear(ks[2], ks[3], 512, latent_dim)
    w_lv, b_lv = linear(ks[4], ks[5], 512, latent_dim)

    padded_out = _round_up(2 * latent_dim, 128)
    w_heads = jnp.zeros((512, padded_out), jnp.float32)
    w_heads = w_heads.at[:, :latent_dim].set(w_mu)
    w_heads = w_heads.at[:, latent_dim:2 * latent_dim].set(w_lv)
    b_heads = jnp.zeros((1, padded_out), jnp.float32)
    b_heads = b_heads.at[:, :latent_dim].set(b_mu)
    b_heads = b_heads.at[:, latent_dim:2 * latent_dim].set(b_lv)

    return dict(
        w_fc=w_fc.astype(jnp.bfloat16), b_fc=b_fc,
        gamma=jnp.ones((1, 512), jnp.float32),   # BatchNorm1d weight
        beta=jnp.zeros((1, 512), jnp.float32),   # BatchNorm1d bias
        w_heads=w_heads.astype(jnp.bfloat16), b_heads=b_heads,
    )


def reference(feat, p, latent_dim):
    """Pure-JAX reference mirroring the kernel's bf16-weight numerics.

    Note: the reference APPLIES b_fc (faithful to the PyTorch module); the
    kernel omits it because training-mode BN cancels it exactly.
    """
    x = feat.astype(jnp.bfloat16).astype(jnp.float32)
    w_fc = p["w_fc"].astype(jnp.float32)
    h = x @ w_fc + p["b_fc"]
    mean = h.mean(axis=0, keepdims=True)
    var = ((h - mean) ** 2).mean(axis=0, keepdims=True)
    h = (h - mean) / jnp.sqrt(var + 1e-5) * p["gamma"] + p["beta"]
    h = jnp.where(h >= 0, h, 0.01 * h)
    h = h.astype(jnp.bfloat16).astype(jnp.float32)
    w_heads = p["w_heads"].astype(jnp.float32)
    out = h @ w_heads + p["b_heads"]
    return out[:, :latent_dim], out[:, latent_dim:2 * latent_dim]


if __name__ == "__main__":
    B, IN_FEATURES, LATENT_DIM = 8, 2048, 32
    key = jax.random.PRNGKey(0)
    k_feat, k_param = jax.random.split(key)

    feat = jax.random.normal(k_feat, (B, IN_FEATURES), jnp.float32)
    params = init_params(k_param, IN_FEATURES, LATENT_DIM)

    mu, log_var = encoder_head(feat, params, LATENT_DIM)
    jax.block_until_ready((mu, log_var))

    mu_ref, lv_ref = reference(feat, params, LATENT_DIM)
    assert mu.shape == (B, LATENT_DIM) and log_var.shape == (B, LATENT_DIM)
    assert jnp.allclose(mu, mu_ref, atol=5e-3, rtol=5e-3)
    assert jnp.allclose(log_var, lv_ref, atol=5e-3, rtol=5e-3)
    print("KERNEL_OK")
</pallas_src>

<mosaic_0001>
module attributes {stable_mosaic.version = 11 : i64} {
  func.func @encoder_head_kernel(%arg0: i32, %arg1: memref<8x1024xbf16, #tpu.memory_space<vmem>>, %arg2: memref<1024x512xbf16, #tpu.memory_space<vmem>>, %arg3: memref<1x512xf32, #tpu.memory_space<vmem>>, %arg4: memref<1x512xf32, #tpu.memory_space<vmem>>, %arg5: memref<512x128xbf16, #tpu.memory_space<vmem>>, %arg6: memref<1x128xf32, #tpu.memory_space<vmem>>, %arg7: memref<8x128xf32, #tpu.memory_space<vmem>>, %arg8: memref<8x512xf32, #tpu.memory_space<vmem>>) attributes {dimension_semantics = [#tpu.dimension_semantics<arbitrary>], iteration_bounds = array<i64: 2>, scalar_prefetch = 0 : i64, scratch_operands = 1 : i64, tpu.core_type = #tpu.core_type<tc>, window_params = [{transform_indices = @transform_0, window_bounds = array<i64: 8, 1024>}, {transform_indices = @transform_1, window_bounds = array<i64: 1024, 512>}, {pipeline_mode = #tpu.pipeline_mode<synchronous>, transform_indices = @transform_2, window_bounds = array<i64: 1, 512>}, {pipeline_mode = #tpu.pipeline_mode<synchronous>, transform_indices = @transform_3, window_bounds = array<i64: 1, 512>}, {pipeline_mode = #tpu.pipeline_mode<synchronous>, transform_indices = @transform_4, window_bounds = array<i64: 512, 128>}, {pipeline_mode = #tpu.pipeline_mode<synchronous>, transform_indices = @transform_5, window_bounds = array<i64: 1, 128>}, {pipeline_mode = #tpu.pipeline_mode<synchronous>, transform_indices = @transform_6, window_bounds = array<i64: 8, 128>}]} {
    %c0_i32 = arith.constant 0 : i32
    %0 = arith.cmpi eq, %arg0, %c0_i32 : i32
    %1 = arith.extui %0 : i1 to i32
    %c0_i32_0 = arith.constant 0 : i32
    %2 = arith.cmpi ne, %1, %c0_i32_0 : i32
    scf.if %2 {
      %cst_9 = arith.constant 0.000000e+00 : f32
      %12 = vector.broadcast %cst_9 : f32 to vector<8x512xf32>
      %c0_10 = arith.constant 0 : index
      %c0_11 = arith.constant 0 : index
      %13 = vector.load %arg8[%c0_10, %c0_11] : memref<8x512xf32, #tpu.memory_space<vmem>>, vector<8x512xf32>
      tpu.vector_store %arg8[%c0_10, %c0_11], %12 {strides = array<i32>} : memref<8x512xf32, #tpu.memory_space<vmem>>, vector<8x512xf32>,
    } else {
    }
    %c0 = arith.constant 0 : index
    %c0_1 = arith.constant 0 : index
    %3 = vector.load %arg8[%c0, %c0_1] : memref<8x512xf32, #tpu.memory_space<vmem>>, vector<8x512xf32>
    %c0_2 = arith.constant 0 : index
    %c0_3 = arith.constant 0 : index
    %4 = vector.load %arg1[%c0_2, %c0_3] : memref<8x1024xbf16, #tpu.memory_space<vmem>>, vector<8x1024xbf16>
    %c0_4 = arith.constant 0 : index
    %c0_5 = arith.constant 0 : index
    %5 = vector.load %arg2[%c0_4, %c0_5] : memref<1024x512xbf16, #tpu.memory_space<vmem>>, vector<1024x512xbf16>
    %cst = arith.constant dense<0.000000e+00> : vector<8x512xf32>
    %6 = tpu.matmul %4, %5, %cst {dimension_numbers = #tpu.dot_dimension_numbers<[1], [0], [0], [1], [0, 0, 1, 1], [], []>} : vector<8x1024xbf16>, vector<1024x512xbf16>, vector<8x512xf32> -> vector<8x512xf32>
    %7 = arith.addf %3, %6 : vector<8x512xf32>
    %c0_6 = arith.constant 0 : index
    %c0_7 = arith.constant 0 : index
    %8 = vector.load %arg8[%c0_6, %c0_7] : memref<8x512xf32, #tpu.memory_space<vmem>>, vector<8x512xf32>
    tpu.vector_store %arg8[%c0_6, %c0_7], %7 {strides = array<i32>} : memref<8x512xf32, #tpu.memory_space<vmem>>, vector<8x512xf32>,
    %c1_i32 = arith.constant 1 : i32
    %9 = arith.cmpi eq, %arg0, %c1_i32 : i32
    %10 = arith.extui %9 : i1 to i32
    %c0_i32_8 = arith.constant 0 : i32
    %11 = arith.cmpi ne, %10, %c0_i32_8 : i32
    scf.if %11 {
      %c0_9 = arith.constant 0 : index
      %c0_10 = arith.constant 0 : index
      %12 = vector.load %arg8[%c0_9, %c0_10] : memref<8x512xf32, #tpu.memory_space<vmem>>, vector<8x512xf32>
      %cst_11 = arith.constant dense<0.000000e+00> : vector<512xf32>
      %13 = vector.multi_reduction <add>, %12, %cst_11 [0] : vector<8x512xf32> to vector<512xf32>
      %14 = vector.shape_cast %13 : vector<512xf32> to vector<1x512xf32>
      %cst_12 = arith.constant 1.250000e-01 : f32
      %15 = vector.broadcast %cst_12 : f32 to vector<1x512xf32>
      %16 = arith.mulf %14, %15 : vector<1x512xf32>
      %17 = vector.broadcast %16 : vector<1x512xf32> to vector<8x512xf32>
      %18 = arith.subf %12, %17 : vector<8x512xf32>
      %19 = arith.mulf %18, %18 : vector<8x512xf32>
      %cst_13 = arith.constant dense<0.000000e+00> : vector<512xf32>
      %20 = vector.multi_reduction <add>, %19, %cst_13 [0] : vector<8x512xf32> to vector<512xf32>
      %21 = vector.shape_cast %20 : vector<512xf32> to vector<1x512xf32>
      %cst_14 = arith.constant 1.250000e-01 : f32
      %22 = vector.broadcast %cst_14 : f32 to vector<1x512xf32>
      %23 = arith.mulf %21, %22 : vector<1x512xf32>
      %cst_15 = arith.constant 9.99999974E-6 : f32
      %24 = vector.broadcast %cst_15 : f32 to vector<1x512xf32>
      %25 = arith.addf %23, %24 : vector<1x512xf32>
      %26 = math.rsqrt %25 : vector<1x512xf32>
      %c0_16 = arith.constant 0 : index
      %c0_17 = arith.constant 0 : index
      %27 = vector.load %arg3[%c0_16, %c0_17] : memref<1x512xf32, #tpu.memory_space<vmem>>, vector<1x512xf32>
      %28 = arith.mulf %26, %27 : vector<1x512xf32>
      %29 = vector.broadcast %28 : vector<1x512xf32> to vector<8x512xf32>
      %30 = arith.mulf %18, %29 : vector<8x512xf32>
      %c0_18 = arith.constant 0 : index
      %c0_19 = arith.constant 0 : index
      %31 = vector.load %arg4[%c0_18, %c0_19] : memref<1x512xf32, #tpu.memory_space<vmem>>, vector<1x512xf32>
      %32 = vector.broadcast %31 : vector<1x512xf32> to vector<8x512xf32>
      %33 = arith.addf %30, %32 : vector<8x512xf32>
      %cst_20 = arith.constant 0.000000e+00 : f32
      %34 = vector.broadcast %cst_20 : f32 to vector<8x512xf32>
      %35 = arith.cmpf oge, %33, %34 : vector<8x512xf32>
      %cst_21 = arith.constant 0.00999999977 : f32
      %36 = vector.broadcast %cst_21 : f32 to vector<8x512xf32>
      %37 = arith.mulf %36, %33 : vector<8x512xf32>
      %38 = arith.select %35, %33, %37 : vector<8x512xi1>, vector<8x512xf32>
      %39 = arith.truncf %38 : vector<8x512xf32> to vector<8x512xbf16>
      %c0_22 = arith.constant 0 : index
      %c0_23 = arith.constant 0 : index
      %40 = vector.load %arg5[%c0_22, %c0_23] : memref<512x128xbf16, #tpu.memory_space<vmem>>, vector<512x128xbf16>
      %cst_24 = arith.constant dense<0.000000e+00> : vector<8x128xf32>
      %41 = tpu.matmul %39, %40, %cst_24 {dimension_numbers = #tpu.dot_dimension_numbers<[1], [0], [0], [1], [0, 0, 1, 1], [], []>} : vector<8x512xbf16>, vector<512x128xbf16>, vector<8x128xf32> -> vector<8x128xf32>
      %c0_25 = arith.constant 0 : index
      %c0_26 = arith.constant 0 : index
      %42 = vector.load %arg6[%c0_25, %c0_26] : memref<1x128xf32, #tpu.memory_space<vmem>>, vector<1x128xf32>
      %43 = vector.broadcast %42 : vector<1x128xf32> to vector<8x128xf32>
      %44 = arith.addf %41, %43 : vector<8x128xf32>
      %c0_27 = arith.constant 0 : index
      %c0_28 = arith.constant 0 : index
      %45 = vector.load %arg7[%c0_27, %c0_28] : memref<8x128xf32, #tpu.memory_space<vmem>>, vector<8x128xf32>
      tpu.vector_store %arg7[%c0_27, %c0_28], %44 {strides = array<i32>} : memref<8x128xf32, #tpu.memory_space<vmem>>, vector<8x128xf32>,
    } else {
    }
    return
  }
  func.func @transform_0(%arg0: i32) -> (i32, i32) {
    %c0_i32 = arith.constant 0 : i32
    %c0_i32_0 = arith.constant 0 : i32
    return %c0_i32, %arg0 : i32, i32
  }
  func.func @transform_1(%arg0: i32) -> (i32, i32) {
    %c0_i32 = arith.constant 0 : i32
    %c0_i32_0 = arith.constant 0 : i32
    return %arg0, %c0_i32 : i32, i32
  }
  func.func @transform_2(%arg0: i32) -> (i32, i32) {
    %c0_i32 = arith.constant 0 : i32
    %c0_i32_0 = arith.constant 0 : i32
    %c0_i32_1 = arith.constant 0 : i32
    return %c0_i32, %c0_i32_0 : i32, i32
  }
  func.func @transform_3(%arg0: i32) -> (i32, i32) {
    %c0_i32 = arith.constant 0 : i32
    %c0_i32_0 = arith.constant 0 : i32
    %c0_i32_1 = arith.constant 0 : i32
    return %c0_i32, %c0_i32_0 : i32, i32
  }
  func.func @transform_4(%arg0: i32) -> (i32, i32) {
    %c0_i32 = arith.constant 0 : i32
    %c0_i32_0 = arith.constant 0 : i32
    %c0_i32_1 = arith.constant 0 : i32
    return %c0_i32, %c0_i32_0 : i32, i32
  }
  func.func @transform_5(%arg0: i32) -> (i32, i32) {
    %c0_i32 = arith.constant 0 : i32
    %c0_i32_0 = arith.constant 0 : i32
    %c0_i32_1 = arith.constant 0 : i32
    return %c0_i32, %c0_i32_0 : i32, i32
  }
  func.func @transform_6(%arg0: i32) -> (i32, i32) {
    %c0_i32 = arith.constant 0 : i32
    %c0_i32_0 = arith.constant 0 : i32
    %c0_i32_1 = arith.constant 0 : i32
    return %c0_i32, %c0_i32_0 : i32, i32
  }
}

</mosaic_0001>

<llo_original>
// kernel: tpu_custom_call.1
$region0: #{tpu_custom_call.1}
  #allocation0 [shape = 'u32[]', space=smem, size = 0x4, offset = 0x4, fixed_abs, tag = 'smem constant byte address 0x4 - core index']
  #allocation1 [shape = 'u32[144,128]{1,0:T(1,128)}', space=vmem, size = 0x12000, scoped, tag = 'internal scratch']
  #allocation2 [shape = 'f32[8,512]{1,0:T(8,128)}', space=vmem, size = 0x4000, scoped, tag = 'scratch operand']
  %s0 = inlined_call_operand.hbm [shape: bf16[8,2048], index: 0, kind: input, shape index: {}]
  %s1 = inlined_call_operand.hbm [shape: bf16[2048,512], index: 1, kind: input, shape index: {}]
  %s2 = inlined_call_operand.hbm [shape: f32[1,512], index: 2, kind: input, shape index: {}]
  %s3 = inlined_call_operand.hbm [shape: f32[1,512], index: 3, kind: input, shape index: {}]
  %s4 = inlined_call_operand.hbm [shape: bf16[512,128], index: 4, kind: input, shape index: {}]
  %s5 = inlined_call_operand.hbm [shape: f32[1,128], index: 5, kind: input, shape index: {}]
  %s6 = inlined_call_operand.hbm [shape: f32[8,128], index: 6, kind: output, shape index: {}]
  %s7 = sld [smem:[#allocation0]]
  $region89: #{tpu_custom_call.1} parent=0
    _
  %s9 = ssub.s32 1, %s7
  %s10 = scalar_select 0, %s9, %s7
  $region1: #{tpu_custom_call.1} parent=0
    #allocation3 [shape = 'u8[32768]{0}', space=vmem, size = 0x8000, scoped, tag = 'input window, operand 0']
    #allocation4 [shape = 's32[2]{0}', space=sflag, size = 0x8, scoped, tag = 'scoped memory for tpu_custom_call.1']
    #allocation5 [shape = 's32[2]{0}', space=sflag, size = 0x8, scoped, tag = 'scoped memory for tpu_custom_call.1']
    #allocation6 [shape = 'u8[2097152]{0}', space=vmem, size = 0x200000, scoped, tag = 'input window, operand 1']
    #allocation7 [shape = 's32[2]{0}', space=sflag, size = 0x8, scoped, tag = 'scoped memory for tpu_custom_call.1']
    #allocation8 [shape = 'u8[2048]{0}', space=vmem, size = 0x800, scoped, tag = 'input window, operand 2, single buffered']
    #allocation9 [shape = 'u8[2048]{0}', space=vmem, size = 0x800, scoped, tag = 'input window, operand 3, single buffered']
    #allocation10 [shape = 's32[1]{0}', space=sflag, size = 0x4, scoped, tag = 'scoped memory for tpu_custom_call.1']
    #allocation11 [shape = 'u8[131072]{0}', space=vmem, size = 0x20000, scoped, tag = 'input window, operand 4, single buffered']
    #allocation12 [shape = 'u8[512]{0}', space=vmem, size = 0x400, scoped, tag = 'input window, operand 5, single buffered']
    #allocation13 [shape = 's32[1]{0}', space=sflag, size = 0x4, scoped, tag = 'scoped memory for tpu_custom_call.1']
    #allocation14 [shape = 'u8[4096]{0}', space=vmem, size = 0x1000, scoped, tag = 'output window, operand 0, single buffered']
    %11 = vsyncpa [#allocation4], 0
    %s12 = scalar_lea.sflag [#allocation4], 1
    %13 = vsyncpa %s12, 0
    %14 = vsyncpa [#allocation7], 0
    %s15 = scalar_lea.sflag [#allocation7], 1
    %16 = vsyncpa %s15, 0
    %17 = vsyncpa [#allocation10], 0
    %18 = vsyncpa [#allocation13], 0
    %19 = vsyncpa [#allocation5], 0
    loop: start=0, step=1, limit=4
    $region2: #{tpu_custom_call.1} parent=1 // loop_pre_header
      _
    $region3: #{tpu_custom_call.1} parent=1 // loop_header
      %s21 = sphi 0, %s25
      %p22 = scmp.ge.s32.totalorder %s21, 4
      %s31 = sphi 0, %s33
      %s34 = sphi 0, %s31
      %s35 = sphi 0, %s34
      %s51 = sphi 0, %s35
      %s57 = sphi 0, %s59
      %s60 = sphi 0, %s57
      %s61 = sphi 0, %s60
      %s77 = sphi 0, %s61
      %s81 = sphi 0, %s81
      %s83 = sphi 0, %s81
      %s84 = sphi 0, %s83
      %s98 = sphi 0, %s84
      %s102 = sphi 0, %s102
      %s104 = sphi 0, %s102
      %s105 = sphi 0, %s104
      %s119 = sphi 0, %s105
      %s123 = sphi 0, %s123
      %s125 = sphi 0, %s123
      %s126 = sphi 0, %s125
      %s140 = sphi 0, %s126
      %s144 = sphi 0, %s144
      %s146 = sphi 0, %s144
      %s147 = sphi 0, %s146
      %s161 = sphi 0, %s147
      %s165 = sphi 0, %s165
      %s167 = sphi 0, %s165
      %s168 = sphi 0, %s167
      %s182 = sphi 0, %s168
    $region4: #{tpu_custom_call.1} parent=1 // loop_header_branch
      %24 = sbr.rel (%p22) target = $region8
    $region5: #{tpu_custom_call.1} parent=1 // loop_body
      %s26 = ssub.s32 %s21, 1
      %s27 = ssub.s32 %s21, 2
      %s28 = sadd.s32 %s21, 1
      %s29 = ssub.s32 %s21, %s28
      %p30 = scmp.eq.s32.totalorder %s29, 0
      %s32 = sadd.s32 %s31, 1
      %s33 = scalar_select %p30, %s31, %s32
      %p36 = pneg %p30
      %p37 = scmp.eq.s32.totalorder %s21, 1
      %p38 = por %p36, %p37
      %p39 = scmp.ne.s32.totalorder %s31, %s34
      %p40 = scmp.eq.s32.totalorder %s21, 0
      %p41 = por %p39, %p40
      %p42 = scmp.ne.s32.totalorder %s31, %s34
      %p43 = scmp.eq.s32.totalorder %s26, 1
      %p44 = por %p42, %p43
      %p45 = scmp.ne.s32.totalorder %s34, %s35
      %p46 = scmp.eq.s32.totalorder %s26, 0
      %p47 = por %p45, %p46
      %p48 = scmp.ne.s32.totalorder %s34, %s35
      %p49 = scmp.eq.s32.totalorder %s27, 1
      %p50 = por %p48, %p49
      %p52 = scmp.ne.s32.totalorder %s35, %s51
      %p53 = scmp.eq.s32.totalorder %s27, 0
      %p54 = por %p52, %p53
      %s55 = ssub.s32 %s21, %s28
      %p56 = scmp.eq.s32.totalorder %s55, 0
      %s58 = sadd.s32 %s57, 1
      %s59 = scalar_select %p56, %s57, %s58
      %p62 = pneg %p56
      %p63 = scmp.eq.s32.totalorder %s21, 1
      %p64 = por %p62, %p63
      %p65 = scmp.ne.s32.totalorder %s57, %s60
      %p66 = scmp.eq.s32.totalorder %s21, 0
      %p67 = por %p65, %p66
      %p68 = scmp.ne.s32.totalorder %s57, %s60
      %p69 = scmp.eq.s32.totalorder %s26, 1
      %p70 = por %p68, %p69
      %p71 = scmp.ne.s32.totalorder %s60, %s61
      %p72 = scmp.eq.s32.totalorder %s26, 0
      %p73 = por %p71, %p72
      %p74 = scmp.ne.s32.totalorder %s60, %s61
      %p75 = scmp.eq.s32.totalorder %s27, 1
      %p76 = por %p74, %p75
      %p78 = scmp.ne.s32.totalorder %s61, %s77
      %p79 = scmp.eq.s32.totalorder %s27, 0
      %p80 = por %p78, %p79
      %s82 = sadd.s32 %s81, 1
      %p85 = scmp.eq.s32.totalorder %s21, 1
      %p86 = scmp.ne.s32.totalorder %s81, %s83
      %p87 = scmp.eq.s32.totalorder %s21, 0
      %p88 = por %p86, %p87
      %p89 = scmp.ne.s32.totalorder %s81, %s83
      %p90 = scmp.eq.s32.totalorder %s26, 1
      %p91 = por %p89, %p90
      %p92 = scmp.ne.s32.totalorder %s83, %s84
      %p93 = scmp.eq.s32.totalorder %s26, 0
      %p94 = por %p92, %p93
      %p95 = scmp.ne.s32.totalorder %s83, %s84
      %p96 = scmp.eq.s32.totalorder %s27, 1
      %p97 = por %p95, %p96
      %p99 = scmp.ne.s32.totalorder %s84, %s98
      %p100 = scmp.eq.s32.totalorder %s27, 0
      %p101 = por %p99, %p100
      %s103 = sadd.s32 %s102, 1
      %p106 = scmp.eq.s32.totalorder %s21, 1
      %p107 = scmp.ne.s32.totalorder %s102, %s104
      %p108 = scmp.eq.s32.totalorder %s21, 0
      %p109 = por %p107, %p108
      %p110 = scmp.ne.s32.totalorder %s102, %s104
      %p111 = scmp.eq.s32.totalorder %s26, 1
      %p112 = por %p110, %p111
      %p113 = scmp.ne.s32.totalorder %s104, %s105
      %p114 = scmp.eq.s32.totalorder %s26, 0
      %p115 = por %p113, %p114
      %p116 = scmp.ne.s32.totalorder %s104, %s105
      %p117 = scmp.eq.s32.totalorder %s27, 1
      %p118 = por %p116, %p117
      %p120 = scmp.ne.s32.totalorder %s105, %s119
      %p121 = scmp.eq.s32.totalorder %s27, 0
      %p122 = por %p120, %p121
      %s124 = sadd.s32 %s123, 1
      %p127 = scmp.eq.s32.totalorder %s21, 1
      %p128 = scmp.ne.s32.totalorder %s123, %s125
      %p129 = scmp.eq.s32.totalorder %s21, 0
      %p130 = por %p128, %p129
      %p131 = scmp.ne.s32.totalorder %s123, %s125
      %p132 = scmp.eq.s32.totalorder %s26, 1
      %p133 = por %p131, %p132
      %p134 = scmp.ne.s32.totalorder %s125, %s126
      %p135 = scmp.eq.s32.totalorder %s26, 0
      %p136 = por %p134, %p135
      %p137 = scmp.ne.s32.totalorder %s125, %s126
      %p138 = scmp.eq.s32.totalorder %s27, 1
      %p139 = por %p137, %p138
      %p141 = scmp.ne.s32.totalorder %s126, %s140
      %p142 = scmp.eq.s32.totalorder %s27, 0
      %p143 = por %p141, %p142
      %s145 = sadd.s32 %s144, 1
      %p148 = scmp.eq.s32.totalorder %s21, 1
      %p149 = scmp.ne.s32.totalorder %s144, %s146
      %p150 = scmp.eq.s32.totalorder %s21, 0
      %p151 = por %p149, %p150
      %p152 = scmp.ne.s32.totalorder %s144, %s146
      %p153 = scmp.eq.s32.totalorder %s26, 1
      %p154 = por %p152, %p153
      %p155 = scmp.ne.s32.totalorder %s146, %s147
      %p156 = scmp.eq.s32.totalorder %s26, 0
      %p157 = por %p155, %p156
      %p158 = scmp.ne.s32.totalorder %s146, %s147
      %p159 = scmp.eq.s32.totalorder %s27, 1
      %p160 = por %p158, %p159
      %p162 = scmp.ne.s32.totalorder %s147, %s161
      %p163 = scmp.eq.s32.totalorder %s27, 0
      %p164 = por %p162, %p163
      %s166 = sadd.s32 %s165, 1
      %p169 = scmp.eq.s32.totalorder %s21, 1
      %p170 = scmp.ne.s32.totalorder %s165, %s167
      %p171 = scmp.eq.s32.totalorder %s21, 0
      %p172 = por %p170, %p171
      %p173 = scmp.ne.s32.totalorder %s165, %s167
      %p174 = scmp.eq.s32.totalorder %s26, 1
      %p175 = por %p173, %p174
      %p176 = scmp.ne.s32.totalorder %s167, %s168
      %p177 = scmp.eq.s32.totalorder %s26, 0
      %p178 = por %p176, %p177
      %p179 = scmp.ne.s32.totalorder %s167, %s168
      %p180 = scmp.eq.s32.totalorder %s27, 1
      %p181 = por %p179, %p180
      %p183 = scmp.ne.s32.totalorder %s168, %s182
      %p184 = scmp.eq.s32.totalorder %s27, 0
      %p185 = por %p183, %p184
      %p186 = scmp.le.s32.totalorder 1, %s21
      %p187 = scmp.lt.s32.totalorder %s21, 3
      %p188 = pnand %p186, %p187
      %p189 = pneg %p188
      // Predicated region
      $region9: #{tpu_custom_call.1} parent=5 // pred_check
        _
      $region10: #{tpu_custom_call.1} parent=5 // pred_check_branch
        %191 = sbr.rel (%p188) target = $region12
      $region11: #{tpu_custom_call.1} parent=5 // pred_region
        %s192 = ssub.s32 %s21, 1
        // Predicated region
        $region13: #{tpu_custom_call.1} parent=11 // pred_check
          %p193 = pneg %p94
        $region14: #{tpu_custom_call.1} parent=11 // pred_check_branch
          %195 = sbr.rel (%p193) target = $region16
        $region15: #{tpu_custom_call.1} parent=11 // pred_region
          %s197 = ssub.s32 64, 64
          %198 = vsyncadd [#allocation7], %s197
          %s200 = sshll.u32 [#allocation8], 4
          %s201 = int_to_ptr.vmem [resolvable:$true] %s200
          %203 = dma.hbm_to_vmem [thread:$0]  %s2, 64, %s201, [#allocation7]
        $region16: #{tpu_custom_call.1} parent=11 // pred_fallthru
          _
        // Predicated region
        $region17: #{tpu_custom_call.1} parent=11 // pred_check
          %p204 = pneg %p115
        $region18: #{tpu_custom_call.1} parent=11 // pred_check_branch
          %206 = sbr.rel (%p204) target = $region20
        $region19: #{tpu_custom_call.1} parent=11 // pred_region
          %s208 = ssub.s32 64, 64
          %209 = vsyncadd [#allocation10], %s208
          %s211 = sshll.u32 [#allocation9], 4
          %s212 = int_to_ptr.vmem [resolvable:$true] %s211
          %214 = dma.hbm_to_vmem [thread:$0]  %s3, 64, %s212, [#allocation10]
        $region20: #{tpu_custom_call.1} parent=11 // pred_fallthru
          _
        // Predicated region
        $region21: #{tpu_custom_call.1} parent=11 // pred_check
          %p215 = pneg %p136
        $region22: #{tpu_custom_call.1} parent=11 // pred_check_branch
          %217 = sbr.rel (%p215) target = $region24
        $region23: #{tpu_custom_call.1} parent=11 // pred_region
          %s219 = ssub.s32 4096, 4096
          %220 = vsyncadd [#allocation10], %s219
          %s221 = sshll.u32 [#allocation11], 4
          %s222 = int_to_ptr.vmem [resolvable:$true] %s221
          %227 = dma.hbm_to_vmem [thread:$0]  %s4, 4096, %s222, [#allocation10], 64, 64, 4
        $region24: #{tpu_custom_call.1} parent=11 // pred_fallthru
          _
        // Predicated region
        $region25: #{tpu_custom_call.1} parent=11 // pred_check
          %p228 = pneg %p157
        $region26: #{tpu_custom_call.1} parent=11 // pred_check_branch
          %230 = sbr.rel (%p228) target = $region28
        $region27: #{tpu_custom_call.1} parent=11 // pred_region
          %s232 = ssub.s32 16, 16
          %233 = vsyncadd [#allocation13], %s232
          %s235 = sshll.u32 [#allocation12], 4
          %s236 = int_to_ptr.vmem [resolvable:$true] %s235
          %238 = dma.hbm_to_vmem [thread:$0]  %s5, 16, %s236, [#allocation13]
        $region28: #{tpu_custom_call.1} parent=11 // pred_fallthru
          _
      $region12: #{tpu_custom_call.1} parent=5 // pred_fallthru
        _
      %p239 = scmp.lt.s32.totalorder %s21, 2
      // Predicated region
      $region29: #{tpu_custom_call.1} parent=5 // pred_check
        %p240 = pneg %p239
      $region30: #{tpu_custom_call.1} parent=5 // pred_check_branch
        %242 = sbr.rel (%p240) target = $region32
      $region31: #{tpu_custom_call.1} parent=5 // pred_region
        // Predicated region
        $region33: #{tpu_custom_call.1} parent=31 // pred_check
          %p243 = pneg %p41
        $region34: #{tpu_custom_call.1} parent=31 // pred_check_branch
          %245 = sbr.rel (%p243) target = $region36
        $region35: #{tpu_custom_call.1} parent=31 // pred_region
          %s246 = sand.u32 %s31, 1
          %s247 = scalar_lea.sflag [#allocation4], %s246
          %s248 = sand.u32 %s31, 1
          %s249 = smul.addr %s248, 32
          %s250 = scalar_lea.vmem [#allocation3], %s249
          %s251 = smul.u32 8, %s21
          %s253 = ssub.s32 512, 512
          %254 = vsyncadd %s247, %s253
          %s255 = smul.addr %s251, 64
          %s256 = scalar_lea.hbm %s0, %s255
          %s258 = sshll.u32 %s250, 4
          %s259 = int_to_ptr.vmem [resolvable:$true] %s258
          %261 = dma.hbm_to_vmem [thread:$0]  %s256, 512, %s259, %s247
        $region36: #{tpu_custom_call.1} parent=31 // pred_fallthru
          _
        // Predicated region
        $region37: #{tpu_custom_call.1} parent=31 // pred_check
          %p262 = pneg %p67
        $region38: #{tpu_custom_call.1} parent=31 // pred_check_branch
          %264 = sbr.rel (%p262) target = $region40
        $region39: #{tpu_custom_call.1} parent=31 // pred_region
          %s265 = sand.u32 %s21, 1
          %s266 = scalar_lea.sflag [#allocation7], %s265
          %s267 = sand.u32 %s57, 1
          %s268 = smul.addr %s267, 2048
          %s269 = scalar_lea.vmem [#allocation6], %s268
          %s270 = smul.u32 128, %s21
          %s272 = ssub.s32 32768, 32768
          %273 = vsyncadd %s266, %s272
          %s274 = smul.addr %s270, 4
          %s275 = smul.addr %s274, 64
          %s276 = scalar_lea.hbm %s1, %s275
          %s277 = sshll.u32 %s269, 4
          %s278 = int_to_ptr.vmem [resolvable:$true] %s277
          %283 = dma.hbm_to_vmem [thread:$0]  %s276, 32768, %s278, %s266, 256, 256, 16
        $region40: #{tpu_custom_call.1} parent=31 // pred_fallthru
          _
      $region32: #{tpu_custom_call.1} parent=5 // pred_fallthru
        _
      %p284 = scmp.le.s32.totalorder 1, %s21
      %p285 = scmp.lt.s32.totalorder %s21, 3
      %p286 = pnand %p284, %p285
      %p287 = pneg %p286
      // Predicated region
      $region41: #{tpu_custom_call.1} parent=5 // pred_check
        _
      $region42: #{tpu_custom_call.1} parent=5 // pred_check_branch
        %289 = sbr.rel (%p286) target = $region44
      $region43: #{tpu_custom_call.1} parent=5 // pred_region
        %s290 = ssub.s32 %s21, 1
        %s291 = sand.u32 %s34, 1
        %s292 = scalar_lea.sflag [#allocation4], %s291
        %s293 = sand.u32 %s34, 1
        %s294 = smul.addr %s293, 32
        %s295 = scalar_lea.vmem [#allocation3], %s294
        // Predicated region
        $region45: #{tpu_custom_call.1} parent=43 // pred_check
          %p296 = pneg %p47
        $region46: #{tpu_custom_call.1} parent=43 // pred_check_branch
          %298 = sbr.rel (%p296) target = $region48
        $region47: #{tpu_custom_call.1} parent=43 // pred_region
          %299 = dma.done %s292, 512
        $region48: #{tpu_custom_call.1} parent=43 // pred_fallthru
          _
        %s300 = sand.u32 %s26, 1
        %s301 = scalar_lea.sflag [#allocation7], %s300
        %s302 = sand.u32 %s60, 1
        %s303 = smul.addr %s302, 2048
        %s304 = scalar_lea.vmem [#allocation6], %s303
        // Predicated region
        $region49: #{tpu_custom_call.1} parent=43 // pred_check
          %p305 = pneg %p73
        $region50: #{tpu_custom_call.1} parent=43 // pred_check_branch
          %307 = sbr.rel (%p305) target = $region52
        $region51: #{tpu_custom_call.1} parent=43 // pred_region
          %308 = dma.done %s301, 32768
        $region52: #{tpu_custom_call.1} parent=43 // pred_fallthru
          _
        // Predicated region
        $region53: #{tpu_custom_call.1} parent=43 // pred_check
          %p309 = pneg %p94
        $region54: #{tpu_custom_call.1} parent=43 // pred_check_branch
          %311 = sbr.rel (%p309) target = $region56
        $region55: #{tpu_custom_call.1} parent=43 // pred_region
          %312 = dma.done [#allocation7], 64
        $region56: #{tpu_custom_call.1} parent=43 // pred_fallthru
          _
        // Predicated region
        $region57: #{tpu_custom_call.1} parent=43 // pred_check
          %p313 = pneg %p115
        $region58: #{tpu_custom_call.1} parent=43 // pred_check_branch
          %315 = sbr.rel (%p313) target = $region60
        $region59: #{tpu_custom_call.1} parent=43 // pred_region
          %316 = dma.done [#allocation10], 64
        $region60: #{tpu_custom_call.1} parent=43 // pred_fallthru
          _
        // Predicated region
        $region61: #{tpu_custom_call.1} parent=43 // pred_check
          %p317 = pneg %p136
        $region62: #{tpu_custom_call.1} parent=43 // pred_check_branch
          %319 = sbr.rel (%p317) target = $region64
        $region63: #{tpu_custom_call.1} parent=43 // pred_region
          %320 = dma.done [#allocation10], 4096
        $region64: #{tpu_custom_call.1} parent=43 // pred_fallthru
          _
        // Predicated region
        $region65: #{tpu_custom_call.1} parent=43 // pred_check
          %p321 = pneg %p157
        $region66: #{tpu_custom_call.1} parent=43 // pred_check_branch
          %323 = sbr.rel (%p321) target = $region68
        $region67: #{tpu_custom_call.1} parent=43 // pred_region
          %324 = dma.done [#allocation13], 16
        $region68: #{tpu_custom_call.1} parent=43 // pred_fallthru
          _
        %s325 = sand.u32 %s34, 1
        %s326 = scalar_lea.sflag [#allocation4], %s325
        %s327 = sand.u32 %s34, 1
        %s328 = smul.addr %s327, 32
        %s329 = scalar_lea.vmem [#allocation3], %s328
        %p330 = pneg %p47
        %p331 = pneg %p44
        %s332 = sand.u32 %s26, 1
        %s333 = scalar_lea.sflag [#allocation7], %s332
        %s334 = sand.u32 %s60, 1
        %s335 = smul.addr %s334, 2048
        %s336 = scalar_lea.vmem [#allocation6], %s335
        %p337 = pneg %p73
        %p338 = pneg %p70
        %p339 = pneg %p94
        %p340 = pneg %p91
        %p341 = pneg %p115
        %p342 = pneg %p112
        %p343 = pneg %p136
        %p344 = pneg %p133
        %p345 = pneg %p157
        %p346 = pneg %p154
        %p347 = pneg %p178
        %p348 = pneg %p175
        %s349 = smul.u32 8, %s26
        %s350 = smul.u32 128, %s26
        %p352 = scmp.eq.s32.totalorder %s26, 0
        // Predicated region
        $region69: #{tpu_custom_call.1} parent=43 // pred_check
          %p353 = pneg %p352
        $region70: #{tpu_custom_call.1} parent=43 // pred_check_branch
          %355 = sbr.rel (%p353) target = $region72
        $region71: #{tpu_custom_call.1} parent=43 // pred_region
          %356 = vst [vmem:[#allocation2] sm:$0xff] 0.0
          %357 = vst [vmem:[#allocation2 + $0x8] sm:$0xff] 0.0
          %358 = vst [vmem:[#allocation2 + $0x10] sm:$0xff] 0.0
          %359 = vst [vmem:[#allocation2 + $0x18] sm:$0xff] 0.0
        $region72: #{tpu_custom_call.1} parent=43 // pred_fallthru
          _
        %v360 = vld [vmem:[#allocation2] sm:$0xff]
        %v361 = vld [vmem:[#allocation2 + $0x8] sm:$0xff]
        %v362 = vld [vmem:[#allocation2 + $0x10] sm:$0xff]
        %v363 = vld [vmem:[#allocation2 + $0x18] sm:$0xff]
        %v364 = vld [vmem:[%s295] sm:$0xff]
        %v365 = vld [vmem:[%s295 + $0x8] sm:$0xff]
        %v366 = vld [vmem:[%s295 + $0x10] sm:$0xff]
        %v367 = vld [vmem:[%s295 + $0x18] sm:$0xff]
        %v368 = vld [vmem:[%s304] sm:$0xff]
        %v369 = vld [vmem:[%s304 + $0x8] sm:$0xff]
        %v370 = vld [vmem:[%s304 + $0x10] sm:$0xff]
        %v371 = vld [vmem:[%s304 + $0x18] sm:$0xff]
        %v372 = vld [vmem:[%s304 + $0x20] sm:$0xff]
        %v373 = vld [vmem:[%s304 + $0x28] sm:$0xff]
        %v374 = vld [vmem:[%s304 + $0x30] sm:$0xff]
        %v375 = vld [vmem:[%s304 + $0x38] sm:$0xff]
        %v376 = vld [vmem:[%s304 + $0x40] sm:$0xff]
        %v377 = vld [vmem:[%s304 + $0x48] sm:$0xff]
        %v378 = vld [vmem:[%s304 + $0x50] sm:$0xff]
        %v379 = vld [vmem:[%s304 + $0x58] sm:$0xff]
        %v380 = vld [vmem:[%s304 + $0x60] sm:$0xff]
        %v381 = vld [vmem:[%s304 + $0x68] sm:$0xff]
        %v382 = vld [vmem:[%s304 + $0x70] sm:$0xff]
        %v383 = vld [vmem:[%s304 + $0x78] sm:$0xff]
        %v384 = vld [vmem:[%s304 + $0x80] sm:$0xff]
        %v385 = vld [vmem:[%s304 + $0x88] sm:$0xff]
        %v386 = vld [vmem:[%s304 + $0x90] sm:$0xff]
        %v387 = vld [vmem:[%s304 + $0x98] sm:$0xff]
        %v388 = vld [vmem:[%s304 + $0xa0] sm:$0xff]
        %v389 = vld [vmem:[%s304 + $0xa8] sm:$0xff]
        %v390 = vld [vmem:[%s304 + $0xb0] sm:$0xff]
        %v391 = vld [vmem:[%s304 + $0xb8] sm:$0xff]
        %v392 = vld [vmem:[%s304 + $0xc0] sm:$0xff]
        %v393 = vld [vmem:[%s304 + $0xc8] sm:$0xff]
        %v394 = vld [vmem:[%s304 + $0xd0] sm:$0xff]
        %v395 = vld [vmem:[%s304 + $0xd8] sm:$0xff]
        %v396 = vld [vmem:[%s304 + $0xe0] sm:$0xff]
        %v397 = vld [vmem:[%s304 + $0xe8] sm:$0xff]
        %v398 = vld [vmem:[%s304 + $0xf0] sm:$0xff]
        %v399 = vld [vmem:[%s304 + $0xf8] sm:$0xff]
        %v400 = vld [vmem:[%s304 + $0x100] sm:$0xff]
        %v401 = vld [vmem:[%s304 + $0x108] sm:$0xff]
        %v402 = vld [vmem:[%s304 + $0x110] sm:$0xff]
        %v403 = vld [vmem:[%s304 + $0x118] sm:$0xff]
        %v404 = vld [vmem:[%s304 + $0x120] sm:$0xff]
        %v405 = vld [vmem:[%s304 + $0x128] sm:$0xff]
        %v406 = vld [vmem:[%s304 + $0x130] sm:$0xff]
        %v407 = vld [vmem:[%s304 + $0x138] sm:$0xff]
        %v408 = vld [vmem:[%s304 + $0x140] sm:$0xff]
        %v409 = vld [vmem:[%s304 + $0x148] sm:$0xff]
        %v410 = vld [vmem:[%s304 + $0x150] sm:$0xff]
        %v411 = vld [vmem:[%s304 + $0x158] sm:$0xff]
        %v412 = vld [vmem:[%s304 + $0x160] sm:$0xff]
        %v413 = vld [vmem:[%s304 + $0x168] sm:$0xff]
        %v414 = vld [vmem:[%s304 + $0x170] sm:$0xff]
        %v415 = vld [vmem:[%s304 + $0x178] sm:$0xff]
        %v416 = vld [vmem:[%s304 + $0x180] sm:$0xff]
        %v417 = vld [vmem:[%s304 + $0x188] sm:$0xff]
        %v418 = vld [vmem:[%s304 + $0x190] sm:$0xff]
        %v419 = vld [vmem:[%s304 + $0x198] sm:$0xff]
        %v420 = vld [vmem:[%s304 + $0x1a0] sm:$0xff]
        %v421 = vld [vmem:[%s304 + $0x1a8] sm:$0xff]
        %v422 = vld [vmem:[%s304 + $0x1b0] sm:$0xff]
        %v423 = vld [vmem:[%s304 + $0x1b8] sm:$0xff]
        %v424 = vld [vmem:[%s304 + $0x1c0] sm:$0xff]
        %v425 = vld [vmem:[%s304 + $0x1c8] sm:$0xff]
        %v426 = vld [vmem:[%s304 + $0x1d0] sm:$0xff]
        %v427 = vld [vmem:[%s304 + $0x1d8] sm:$0xff]
        %v428 = vld [vmem:[%s304 + $0x1e0] sm:$0xff]
        %v429 = vld [vmem:[%s304 + $0x1e8] sm:$0xff]
        %v430 = vld [vmem:[%s304 + $0x1f0] sm:$0xff]
        %v431 = vld [vmem:[%s304 + $0x1f8] sm:$0xff]
        %v432 = vld [vmem:[%s304 + $0x200] sm:$0xff]
        %v433 = vld [vmem:[%s304 + $0x208] sm:$0xff]
        %v434 = vld [vmem:[%s304 + $0x210] sm:$0xff]
        %v435 = vld [vmem:[%s304 + $0x218] sm:$0xff]
        %v436 = vld [vmem:[%s304 + $0x220] sm:$0xff]
        %v437 = vld [vmem:[%s304 + $0x228] sm:$0xff]
        %v438 = vld [vmem:[%s304 + $0x230] sm:$0xff]
        %v439 = vld [vmem:[%s304 + $0x238] sm:$0xff]
        %v440 = vld [vmem:[%s304 + $0x240] sm:$0xff]
        %v441 = vld [vmem:[%s304 + $0x248] sm:$0xff]
        %v442 = vld [vmem:[%s304 + $0x250] sm:$0xff]
        %v443 = vld [vmem:[%s304 + $0x258] sm:$0xff]
        %v444 = vld [vmem:[%s304 + $0x260] sm:$0xff]
        %v445 = vld [vmem:[%s304 + $0x268] sm:$0xff]
        %v446 = vld [vmem:[%s304 + $0x270] sm:$0xff]
        %v447 = vld [vmem:[%s304 + $0x278] sm:$0xff]
        %v448 = vld [vmem:[%s304 + $0x280] sm:$0xff]
        %v449 = vld [vmem:[%s304 + $0x288] sm:$0xff]
        %v450 = vld [vmem:[%s304 + $0x290] sm:$0xff]
        %v451 = vld [vmem:[%s304 + $0x298] sm:$0xff]
        %v452 = vld [vmem:[%s304 + $0x2a0] sm:$0xff]
        %v453 = vld [vmem:[%s304 + $0x2a8] sm:$0xff]
        %v454 = vld [vmem:[%s304 + $0x2b0] sm:$0xff]
        %v455 = vld [vmem:[%s304 + $0x2b8] sm:$0xff]
        %v456 = vld [vmem:[%s304 + $0x2c0] sm:$0xff]
        %v457 = vld [vmem:[%s304 + $0x2c8] sm:$0xff]
        %v458 = vld [vmem:[%s304 + $0x2d0] sm:$0xff]
        %v459 = vld [vmem:[%s304 + $0x2d8] sm:$0xff]
        %v460 = vld [vmem:[%s304 + $0x2e0] sm:$0xff]
        %v461 = vld [vmem:[%s304 + $0x2e8] sm:$0xff]
        %v462 = vld [vmem:[%s304 + $0x2f0] sm:$0xff]
        %v463 = vld [vmem:[%s304 + $0x2f8] sm:$0xff]
        %v464 = vld [vmem:[%s304 + $0x300] sm:$0xff]
        %v465 = vld [vmem:[%s304 + $0x308] sm:$0xff]
        %v466 = vld [vmem:[%s304 + $0x310] sm:$0xff]
        %v467 = vld [vmem:[%s304 + $0x318] sm:$0xff]
        %v468 = vld [vmem:[%s304 + $0x320] sm:$0xff]
        %v469 = vld [vmem:[%s304 + $0x328] sm:$0xff]
        %v470 = vld [vmem:[%s304 + $0x330] sm:$0xff]
        %v471 = vld [vmem:[%s304 + $0x338] sm:$0xff]
        %v472 = vld [vmem:[%s304 + $0x340] sm:$0xff]
        %v473 = vld [vmem:[%s304 + $0x348] sm:$0xff]
        %v474 = vld [vmem:[%s304 + $0x350] sm:$0xff]
        %v475 = vld [vmem:[%s304 + $0x358] sm:$0xff]
        %v476 = vld [vmem:[%s304 + $0x360] sm:$0xff]
        %v477 = vld [vmem:[%s304 + $0x368] sm:$0xff]
        %v478 = vld [vmem:[%s304 + $0x370] sm:$0xff]
        %v479 = vld [vmem:[%s304 + $0x378] sm:$0xff]
        %v480 = vld [vmem:[%s304 + $0x380] sm:$0xff]
        %v481 = vld [vmem:[%s304 + $0x388] sm:$0xff]
        %v482 = vld [vmem:[%s304 + $0x390] sm:$0xff]
        %v483 = vld [vmem:[%s304 + $0x398] sm:$0xff]
        %v484 = vld [vmem:[%s304 + $0x3a0] sm:$0xff]
        %v485 = vld [vmem:[%s304 + $0x3a8] sm:$0xff]
        %v486 = vld [vmem:[%s304 + $0x3b0] sm:$0xff]
        %v487 = vld [vmem:[%s304 + $0x3b8] sm:$0xff]
        %v488 = vld [vmem:[%s304 + $0x3c0] sm:$0xff]
        %v489 = vld [vmem:[%s304 + $0x3c8] sm:$0xff]
        %v490 = vld [vmem:[%s304 + $0x3d0] sm:$0xff]
        %v491 = vld [vmem:[%s304 + $0x3d8] sm:$0xff]
        %v492 = vld [vmem:[%s304 + $0x3e0] sm:$0xff]
        %v493 = vld [vmem:[%s304 + $0x3e8] sm:$0xff]
        %v494 = vld [vmem:[%s304 + $0x3f0] sm:$0xff]
        %v495 = vld [vmem:[%s304 + $0x3f8] sm:$0xff]
        %v496 = vld [vmem:[%s304 + $0x400] sm:$0xff]
        %v497 = vld [vmem:[%s304 + $0x408] sm:$0xff]
        %v498 = vld [vmem:[%s304 + $0x410] sm:$0xff]
        %v499 = vld [vmem:[%s304 + $0x418] sm:$0xff]
        %v500 = vld [vmem:[%s304 + $0x420] sm:$0xff]
        %v501 = vld [vmem:[%s304 + $0x428] sm:$0xff]
        %v502 = vld [vmem:[%s304 + $0x430] sm:$0xff]
        %v503 = vld [vmem:[%s304 + $0x438] sm:$0xff]
        %v504 = vld [vmem:[%s304 + $0x440] sm:$0xff]
        %v505 = vld [vmem:[%s304 + $0x448] sm:$0xff]
        %v506 = vld [vmem:[%s304 + $0x450] sm:$0xff]
        %v507 = vld [vmem:[%s304 + $0x458] sm:$0xff]
        %v508 = vld [vmem:[%s304 + $0x460] sm:$0xff]
        %v509 = vld [vmem:[%s304 + $0x468] sm:$0xff]
        %v510 = vld [vmem:[%s304 + $0x470] sm:$0xff]
        %v511 = vld [vmem:[%s304 + $0x478] sm:$0xff]
        %v512 = vld [vmem:[%s304 + $0x480] sm:$0xff]
        %v513 = vld [vmem:[%s304 + $0x488] sm:$0xff]
        %v514 = vld [vmem:[%s304 + $0x490] sm:$0xff]
        %v515 = vld [vmem:[%s304 + $0x498] sm:$0xff]
        %v516 = vld [vmem:[%s304 + $0x4a0] sm:$0xff]
        %v517 = vld [vmem:[%s304 + $0x4a8] sm:$0xff]
        %v518 = vld [vmem:[%s304 + $0x4b0] sm:$0xff]
        %v519 = vld [vmem:[%s304 + $0x4b8] sm:$0xff]
        %v520 = vld [vmem:[%s304 + $0x4c0] sm:$0xff]
        %v521 = vld [vmem:[%s304 + $0x4c8] sm:$0xff]
        %v522 = vld [vmem:[%s304 + $0x4d0] sm:$0xff]
        %v523 = vld [vmem:[%s304 + $0x4d8] sm:$0xff]
        %v524 = vld [vmem:[%s304 + $0x4e0] sm:$0xff]
        %v525 = vld [vmem:[%s304 + $0x4e8] sm:$0xff]
        %v526 = vld [vmem:[%s304 + $0x4f0] sm:$0xff]
        %v527 = vld [vmem:[%s304 + $0x4f8] sm:$0xff]
        %v528 = vld [vmem:[%s304 + $0x500] sm:$0xff]
        %v529 = vld [vmem:[%s304 + $0x508] sm:$0xff]
        %v530 = vld [vmem:[%s304 + $0x510] sm:$0xff]
        %v531 = vld [vmem:[%s304 + $0x518] sm:$0xff]
        %v532 = vld [vmem:[%s304 + $0x520] sm:$0xff]
        %v533 = vld [vmem:[%s304 + $0x528] sm:$0xff]
        %v534 = vld [vmem:[%s304 + $0x530] sm:$0xff]
        %v535 = vld [vmem:[%s304 + $0x538] sm:$0xff]
        %v536 = vld [vmem:[%s304 + $0x540] sm:$0xff]
        %v537 = vld [vmem:[%s304 + $0x548] sm:$0xff]
        %v538 = vld [vmem:[%s304 + $0x550] sm:$0xff]
        %v539 = vld [vmem:[%s304 + $0x558] sm:$0xff]
        %v540 = vld [vmem:[%s304 + $0x560] sm:$0xff]
        %v541 = vld [vmem:[%s304 + $0x568] sm:$0xff]
        %v542 = vld [vmem:[%s304 + $0x570] sm:$0xff]
        %v543 = vld [vmem:[%s304 + $0x578] sm:$0xff]
        %v544 = vld [vmem:[%s304 + $0x580] sm:$0xff]
        %v545 = vld [vmem:[%s304 + $0x588] sm:$0xff]
        %v546 = vld [vmem:[%s304 + $0x590] sm:$0xff]
        %v547 = vld [vmem:[%s304 + $0x598] sm:$0xff]
        %v548 = vld [vmem:[%s304 + $0x5a0] sm:$0xff]
        %v549 = vld [vmem:[%s304 + $0x5a8] sm:$0xff]
        %v550 = vld [vmem:[%s304 + $0x5b0] sm:$0xff]
        %v551 = vld [vmem:[%s304 + $0x5b8] sm:$0xff]
        %v552 = vld [vmem:[%s304 + $0x5c0] sm:$0xff]
        %v553 = vld [vmem:[%s304 + $0x5c8] sm:$0xff]
        %v554 = vld [vmem:[%s304 + $0x5d0] sm:$0xff]
        %v555 = vld [vmem:[%s304 + $0x5d8] sm:$0xff]
        %v556 = vld [vmem:[%s304 + $0x5e0] sm:$0xff]
        %v557 = vld [vmem:[%s304 + $0x5e8] sm:$0xff]
        %v558 = vld [vmem:[%s304 + $0x5f0] sm:$0xff]
        %v559 = vld [vmem:[%s304 + $0x5f8] sm:$0xff]
        %v560 = vld [vmem:[%s304 + $0x600] sm:$0xff]
        %v561 = vld [vmem:[%s304 + $0x608] sm:$0xff]
        %v562 = vld [vmem:[%s304 + $0x610] sm:$0xff]
        %v563 = vld [vmem:[%s304 + $0x618] sm:$0xff]
        %v564 = vld [vmem:[%s304 + $0x620] sm:$0xff]
        %v565 = vld [vmem:[%s304 + $0x628] sm:$0xff]
        %v566 = vld [vmem:[%s304 + $0x630] sm:$0xff]
        %v567 = vld [vmem:[%s304 + $0x638] sm:$0xff]
        %v568 = vld [vmem:[%s304 + $0x640] sm:$0xff]
        %v569 = vld [vmem:[%s304 + $0x648] sm:$0xff]
        %v570 = vld [vmem:[%s304 + $0x650] sm:$0xff]
        %v571 = vld [vmem:[%s304 + $0x658] sm:$0xff]
        %v572 = vld [vmem:[%s304 + $0x660] sm:$0xff]
        %v573 = vld [vmem:[%s304 + $0x668] sm:$0xff]
        %v574 = vld [vmem:[%s304 + $0x670] sm:$0xff]
        %v575 = vld [vmem:[%s304 + $0x678] sm:$0xff]
        %v576 = vld [vmem:[%s304 + $0x680] sm:$0xff]
        %v577 = vld [vmem:[%s304 + $0x688] sm:$0xff]
        %v578 = vld [vmem:[%s304 + $0x690] sm:$0xff]
        %v579 = vld [vmem:[%s304 + $0x698] sm:$0xff]
        %v580 = vld [vmem:[%s304 + $0x6a0] sm:$0xff]
        %v581 = vld [vmem:[%s304 + $0x6a8] sm:$0xff]
        %v582 = vld [vmem:[%s304 + $0x6b0] sm:$0xff]
        %v583 = vld [vmem:[%s304 + $0x6b8] sm:$0xff]
        %v584 = vld [vmem:[%s304 + $0x6c0] sm:$0xff]
        %v585 = vld [vmem:[%s304 + $0x6c8] sm:$0xff]
        %v586 = vld [vmem:[%s304 + $0x6d0] sm:$0xff]
        %v587 = vld [vmem:[%s304 + $0x6d8] sm:$0xff]
        %v588 = vld [vmem:[%s304 + $0x6e0] sm:$0xff]
        %v589 = vld [vmem:[%s304 + $0x6e8] sm:$0xff]
        %v590 = vld [vmem:[%s304 + $0x6f0] sm:$0xff]
        %v591 = vld [vmem:[%s304 + $0x6f8] sm:$0xff]
        %v592 = vld [vmem:[%s304 + $0x700] sm:$0xff]
        %v593 = vld [vmem:[%s304 + $0x708] sm:$0xff]
        %v594 = vld [vmem:[%s304 + $0x710] sm:$0xff]
        %v595 = vld [vmem:[%s304 + $0x718] sm:$0xff]
        %v596 = vld [vmem:[%s304 + $0x720] sm:$0xff]
        %v597 = vld [vmem:[%s304 + $0x728] sm:$0xff]
        %v598 = vld [vmem:[%s304 + $0x730] sm:$0xff]
        %v599 = vld [vmem:[%s304 + $0x738] sm:$0xff]
        %v600 = vld [vmem:[%s304 + $0x740] sm:$0xff]
        %v601 = vld [vmem:[%s304 + $0x748] sm:$0xff]
        %v602 = vld [vmem:[%s304 + $0x750] sm:$0xff]
        %v603 = vld [vmem:[%s304 + $0x758] sm:$0xff]
        %v604 = vld [vmem:[%s304 + $0x760] sm:$0xff]
        %v605 = vld [vmem:[%s304 + $0x768] sm:$0xff]
        %v606 = vld [vmem:[%s304 + $0x770] sm:$0xff]
        %v607 = vld [vmem:[%s304 + $0x778] sm:$0xff]
        %v608 = vld [vmem:[%s304 + $0x780] sm:$0xff]
        %v609 = vld [vmem:[%s304 + $0x788] sm:$0xff]
        %v610 = vld [vmem:[%s304 + $0x790] sm:$0xff]
        %v611 = vld [vmem:[%s304 + $0x798] sm:$0xff]
        %v612 = vld [vmem:[%s304 + $0x7a0] sm:$0xff]
        %v613 = vld [vmem:[%s304 + $0x7a8] sm:$0xff]
        %v614 = vld [vmem:[%s304 + $0x7b0] sm:$0xff]
        %v615 = vld [vmem:[%s304 + $0x7b8] sm:$0xff]
        %v616 = vld [vmem:[%s304 + $0x7c0] sm:$0xff]
        %v617 = vld [vmem:[%s304 + $0x7c8] sm:$0xff]
        %v618 = vld [vmem:[%s304 + $0x7d0] sm:$0xff]
        %v619 = vld [vmem:[%s304 + $0x7d8] sm:$0xff]
        %v620 = vld [vmem:[%s304 + $0x7e0] sm:$0xff]
        %v621 = vld [vmem:[%s304 + $0x7e8] sm:$0xff]
        %v622 = vld [vmem:[%s304 + $0x7f0] sm:$0xff]
        %v623 = vld [vmem:[%s304 + $0x7f8] sm:$0xff]
        %v628 = vunpack.c.l.b16 %v364
        %v629 = vunpack.c.h.b16 %v364
        %v630 = vunpack.c.l.b16 %v365
        %v631 = vunpack.c.h.b16 %v365
        %v632 = vunpack.c.l.b16 %v366
        %v633 = vunpack.c.h.b16 %v366
        %v634 = vunpack.c.l.b16 %v367
        %v635 = vunpack.c.h.b16 %v367
        %v636 = vpack.c.b16 %v628, %v628
        %v637 = vpack.c.b16 %v629, %v629
        %v638 = vpack.c.b16 %v630, %v630
        %v639 = vpack.c.b16 %v631, %v631
        %v640 = vpack.c.b16 %v632, %v632
        %v641 = vpack.c.b16 %v633, %v633
        %v642 = vpack.c.b16 %v634, %v634
        %v643 = vpack.c.b16 %v635, %v635
        %v908 = vunpack.c.l.b16 %v368
        %v909 = vunpack.c.h.b16 %v368
        %v910 = vunpack.c.l.b16 %v369
        %v911 = vunpack.c.h.b16 %v369
        %v912 = vunpack.c.l.b16 %v370
        %v913 = vunpack.c.h.b16 %v370
        %v914 = vunpack.c.l.b16 %v371
        %v915 = vunpack.c.h.b16 %v371
        %v916 = vunpack.c.l.b16 %v372
        %v917 = vunpack.c.h.b16 %v372
        %v918 = vunpack.c.l.b16 %v373
        %v919 = vunpack.c.h.b16 %v373
        %v920 = vunpack.c.l.b16 %v374
        %v921 = vunpack.c.h.b16 %v374
        %v922 = vunpack.c.l.b16 %v375
        %v923 = vunpack.c.h.b16 %v375
        %v924 = vunpack.c.l.b16 %v376
        %v925 = vunpack.c.h.b16 %v376
        %v926 = vunpack.c.l.b16 %v377
        %v927 = vunpack.c.h.b16 %v377
        %v928 = vunpack.c.l.b16 %v378
        %v929 = vunpack.c.h.b16 %v378
        %v930 = vunpack.c.l.b16 %v379
        %v931 = vunpack.c.h.b16 %v379
        %v932 = vunpack.c.l.b16 %v380
        %v933 = vunpack.c.h.b16 %v380
        %v934 = vunpack.c.l.b16 %v381
        %v935 = vunpack.c.h.b16 %v381
        %v936 = vunpack.c.l.b16 %v382
        %v937 = vunpack.c.h.b16 %v382
        %v938 = vunpack.c.l.b16 %v383
        %v939 = vunpack.c.h.b16 %v383
        %v940 = vunpack.c.l.b16 %v384
        %v941 = vunpack.c.h.b16 %v384
        %v942 = vunpack.c.l.b16 %v385
        %v943 = vunpack.c.h.b16 %v385
        %v944 = vunpack.c.l.b16 %v386
        %v945 = vunpack.c.h.b16 %v386
        %v946 = vunpack.c.l.b16 %v387
        %v947 = vunpack.c.h.b16 %v387
        %v948 = vunpack.c.l.b16 %v388
        %v949 = vunpack.c.h.b16 %v388
        %v950 = vunpack.c.l.b16 %v389
        %v951 = vunpack.c.h.b16 %v389
        %v952 = vunpack.c.l.b16 %v390
        %v953 = vunpack.c.h.b16 %v390
        %v954 = vunpack.c.l.b16 %v391
        %v955 = vunpack.c.h.b16 %v391
        %v956 = vunpack.c.l.b16 %v392
        %v957 = vunpack.c.h.b16 %v392
        %v958 = vunpack.c.l.b16 %v393
        %v959 = vunpack.c.h.b16 %v393
        %v960 = vunpack.c.l.b16 %v394
        %v961 = vunpack.c.h.b16 %v394
        %v962 = vunpack.c.l.b16 %v395
        %v963 = vunpack.c.h.b16 %v395
        %v964 = vunpack.c.l.b16 %v396
        %v965 = vunpack.c.h.b16 %v396
        %v966 = vunpack.c.l.b16 %v397
        %v967 = vunpack.c.h.b16 %v397
        %v968 = vunpack.c.l.b16 %v398
        %v969 = vunpack.c.h.b16 %v398
        %v970 = vunpack.c.l.b16 %v399
        %v971 = vunpack.c.h.b16 %v399
        %v972 = vunpack.c.l.b16 %v400
        %v973 = vunpack.c.h.b16 %v400
        %v974 = vunpack.c.l.b16 %v401
        %v975 = vunpack.c.h.b16 %v401
        %v976 = vunpack.c.l.b16 %v402
        %v977 = vunpack.c.h.b16 %v402
        %v978 = vunpack.c.l.b16 %v403
        %v979 = vunpack.c.h.b16 %v403
        %v980 = vunpack.c.l.b16 %v404
        %v981 = vunpack.c.h.b16 %v404
        %v982 = vunpack.c.l.b16 %v405
        %v983 = vunpack.c.h.b16 %v405
        %v984 = vunpack.c.l.b16 %v406
        %v985 = vunpack.c.h.b16 %v406
        %v986 = vunpack.c.l.b16 %v407
        %v987 = vunpack.c.h.b16 %v407
        %v988 = vunpack.c.l.b16 %v408
        %v989 = vunpack.c.h.b16 %v408
        %v990 = vunpack.c.l.b16 %v409
        %v991 = vunpack.c.h.b16 %v409
        %v992 = vunpack.c.l.b16 %v410
        %v993 = vunpack.c.h.b16 %v410
        %v994 = vunpack.c.l.b16 %v411
        %v995 = vunpack.c.h.b16 %v411
        %v996 = vunpack.c.l.b16 %v412
        %v997 = vunpack.c.h.b16 %v412
        %v998 = vunpack.c.l.b16 %v413
        %v999 = vunpack.c.h.b16 %v413
        %v1000 = vunpack.c.l.b16 %v414
        %v1001 = vunpack.c.h.b16 %v414
        %v1002 = vunpack.c.l.b16 %v415
        %v1003 = vunpack.c.h.b16 %v415
        %v1004 = vunpack.c.l.b16 %v416
        %v1005 = vunpack.c.h.b16 %v416
        %v1006 = vunpack.c.l.b16 %v417
        %v1007 = vunpack.c.h.b16 %v417
        %v1008 = vunpack.c.l.b16 %v418
        %v1009 = vunpack.c.h.b16 %v418
        %v1010 = vunpack.c.l.b16 %v419
        %v1011 = vunpack.c.h.b16 %v419
        %v1012 = vunpack.c.l.b16 %v420
        %v1013 = vunpack.c.h.b16 %v420
        %v1014 = vunpack.c.l.b16 %v421
        %v1015 = vunpack.c.h.b16 %v421
        %v1016 = vunpack.c.l.b16 %v422
        %v1017 = vunpack.c.h.b16 %v422
        %v1018 = vunpack.c.l.b16 %v423
        %v1019 = vunpack.c.h.b16 %v423
        %v1020 = vunpack.c.l.b16 %v424
        %v1021 = vunpack.c.h.b16 %v424
        %v1022 = vunpack.c.l.b16 %v425
        %v1023 = vunpack.c.h.b16 %v425
        %v1024 = vunpack.c.l.b16 %v426
        %v1025 = vunpack.c.h.b16 %v426
        %v1026 = vunpack.c.l.b16 %v427
        %v1027 = vunpack.c.h.b16 %v427
        %v1028 = vunpack.c.l.b16 %v428
        %v1029 = vunpack.c.h.b16 %v428
        %v1030 = vunpack.c.l.b16 %v429
        %v1031 = vunpack.c.h.b16 %v429
        %v1032 = vunpack.c.l.b16 %v430
        %v1033 = vunpack.c.h.b16 %v430
        %v1034 = vunpack.c.l.b16 %v431
        %v1035 = vunpack.c.h.b16 %v431
        %v1036 = vunpack.c.l.b16 %v432
        %v1037 = vunpack.c.h.b16 %v432
        %v1038 = vunpack.c.l.b16 %v433
        %v1039 = vunpack.c.h.b16 %v433
        %v1040 = vunpack.c.l.b16 %v434
        %v1041 = vunpack.c.h.b16 %v434
        %v1042 = vunpack.c.l.b16 %v435
        %v1043 = vunpack.c.h.b16 %v435
        %v1044 = vunpack.c.l.b16 %v436
        %v1045 = vunpack.c.h.b16 %v436
        %v1046 = vunpack.c.l.b16 %v437
        %v1047 = vunpack.c.h.b16 %v437
        %v1048 = vunpack.c.l.b16 %v438
        %v1049 = vunpack.c.h.b16 %v438
        %v1050 = vunpack.c.l.b16 %v439
        %v1051 = vunpack.c.h.b16 %v439
        %v1052 = vunpack.c.l.b16 %v440
        %v1053 = vunpack.c.h.b16 %v440
        %v1054 = vunpack.c.l.b16 %v441
        %v1055 = vunpack.c.h.b16 %v441
        %v1056 = vunpack.c.l.b16 %v442
        %v1057 = vunpack.c.h.b16 %v442
        %v1058 = vunpack.c.l.b16 %v443
        %v1059 = vunpack.c.h.b16 %v443
        %v1060 = vunpack.c.l.b16 %v444
        %v1061 = vunpack.c.h.b16 %v444
        %v1062 = vunpack.c.l.b16 %v445
        %v1063 = vunpack.c.h.b16 %v445
        %v1064 = vunpack.c.l.b16 %v446
        %v1065 = vunpack.c.h.b16 %v446
        %v1066 = vunpack.c.l.b16 %v447
        %v1067 = vunpack.c.h.b16 %v447
        %v1068 = vunpack.c.l.b16 %v448
        %v1069 = vunpack.c.h.b16 %v448
        %v1070 = vunpack.c.l.b16 %v449
        %v1071 = vunpack.c.h.b16 %v449
        %v1072 = vunpack.c.l.b16 %v450
        %v1073 = vunpack.c.h.b16 %v450
        %v1074 = vunpack.c.l.b16 %v451
        %v1075 = vunpack.c.h.b16 %v451
        %v1076 = vunpack.c.l.b16 %v452
        %v1077 = vunpack.c.h.b16 %v452
        %v1078 = vunpack.c.l.b16 %v453
        %v1079 = vunpack.c.h.b16 %v453
        %v1080 = vunpack.c.l.b16 %v454
        %v1081 = vunpack.c.h.b16 %v454
        %v1082 = vunpack.c.l.b16 %v455
        %v1083 = vunpack.c.h.b16 %v455
        %v1084 = vunpack.c.l.b16 %v456
        %v1085 = vunpack.c.h.b16 %v456
        %v1086 = vunpack.c.l.b16 %v457
        %v1087 = vunpack.c.h.b16 %v457
        %v1088 = vunpack.c.l.b16 %v458
        %v1089 = vunpack.c.h.b16 %v458
        %v1090 = vunpack.c.l.b16 %v459
        %v1091 = vunpack.c.h.b16 %v459
        %v1092 = vunpack.c.l.b16 %v460
        %v1093 = vunpack.c.h.b16 %v460
        %v1094 = vunpack.c.l.b16 %v461
        %v1095 = vunpack.c.h.b16 %v461
        %v1096 = vunpack.c.l.b16 %v462
        %v1097 = vunpack.c.h.b16 %v462
        %v1098 = vunpack.c.l.b16 %v463
        %v1099 = vunpack.c.h.b16 %v463
        %v1100 = vunpack.c.l.b16 %v464
        %v1101 = vunpack.c.h.b16 %v464
        %v1102 = vunpack.c.l.b16 %v465
        %v1103 = vunpack.c.h.b16 %v465
        %v1104 = vunpack.c.l.b16 %v466
        %v1105 = vunpack.c.h.b16 %v466
        %v1106 = vunpack.c.l.b16 %v467
        %v1107 = vunpack.c.h.b16 %v467
        %v1108 = vunpack.c.l.b16 %v468
        %v1109 = vunpack.c.h.b16 %v468
        %v1110 = vunpack.c.l.b16 %v469
        %v1111 = vunpack.c.h.b16 %v469
        %v1112 = vunpack.c.l.b16 %v470
        %v1113 = vunpack.c.h.b16 %v470
        %v1114 = vunpack.c.l.b16 %v471
        %v1115 = vunpack.c.h.b16 %v471
        %v1116 = vunpack.c.l.b16 %v472
        %v1117 = vunpack.c.h.b16 %v472
        %v1118 = vunpack.c.l.b16 %v473
        %v1119 = vunpack.c.h.b16 %v473
        %v1120 = vunpack.c.l.b16 %v474
        %v1121 = vunpack.c.h.b16 %v474
        %v1122 = vunpack.c.l.b16 %v475
        %v1123 = vunpack.c.h.b16 %v475
        %v1124 = vunpack.c.l.b16 %v476
        %v1125 = vunpack.c.h.b16 %v476
        %v1126 = vunpack.c.l.b16 %v477
        %v1127 = vunpack.c.h.b16 %v477
        %v1128 = vunpack.c.l.b16 %v478
        %v1129 = vunpack.c.h.b16 %v478
        %v1130 = vunpack.c.l.b16 %v479
        %v1131 = vunpack.c.h.b16 %v479
        %v1132 = vunpack.c.l.b16 %v480
        %v1133 = vunpack.c.h.b16 %v480
        %v1134 = vunpack.c.l.b16 %v481
        %v1135 = vunpack.c.h.b16 %v481
        %v1136 = vunpack.c.l.b16 %v482
        %v1137 = vunpack.c.h.b16 %v482
        %v1138 = vunpack.c.l.b16 %v483
        %v1139 = vunpack.c.h.b16 %v483
        %v1140 = vunpack.c.l.b16 %v484
        %v1141 = vunpack.c.h.b16 %v484
        %v1142 = vunpack.c.l.b16 %v485
        %v1143 = vunpack.c.h.b16 %v485
        %v1144 = vunpack.c.l.b16 %v486
        %v1145 = vunpack.c.h.b16 %v486
        %v1146 = vunpack.c.l.b16 %v487
        %v1147 = vunpack.c.h.b16 %v487
        %v1148 = vunpack.c.l.b16 %v488
        %v1149 = vunpack.c.h.b16 %v488
        %v1150 = vunpack.c.l.b16 %v489
        %v1151 = vunpack.c.h.b16 %v489
        %v1152 = vunpack.c.l.b16 %v490
        %v1153 = vunpack.c.h.b16 %v490
        %v1154 = vunpack.c.l.b16 %v491
        %v1155 = vunpack.c.h.b16 %v491
        %v1156 = vunpack.c.l.b16 %v492
        %v1157 = vunpack.c.h.b16 %v492
        %v1158 = vunpack.c.l.b16 %v493
        %v1159 = vunpack.c.h.b16 %v493
        %v1160 = vunpack.c.l.b16 %v494
        %v1161 = vunpack.c.h.b16 %v494
        %v1162 = vunpack.c.l.b16 %v495
        %v1163 = vunpack.c.h.b16 %v495
        %v1164 = vunpack.c.l.b16 %v496
        %v1165 = vunpack.c.h.b16 %v496
        %v1166 = vunpack.c.l.b16 %v497
        %v1167 = vunpack.c.h.b16 %v497
        %v1168 = vunpack.c.l.b16 %v498
        %v1169 = vunpack.c.h.b16 %v498
        %v1170 = vunpack.c.l.b16 %v499
        %v1171 = vunpack.c.h.b16 %v499
        %v1172 = vunpack.c.l.b16 %v500
        %v1173 = vunpack.c.h.b16 %v500
        %v1174 = vunpack.c.l.b16 %v501
        %v1175 = vunpack.c.h.b16 %v501
        %v1176 = vunpack.c.l.b16 %v502
        %v1177 = vunpack.c.h.b16 %v502
        %v1178 = vunpack.c.l.b16 %v503
        %v1179 = vunpack.c.h.b16 %v503
        %v1180 = vunpack.c.l.b16 %v504
        %v1181 = vunpack.c.h.b16 %v504
        %v1182 = vunpack.c.l.b16 %v505
        %v1183 = vunpack.c.h.b16 %v505
        %v1184 = vunpack.c.l.b16 %v506
        %v1185 = vunpack.c.h.b16 %v506
        %v1186 = vunpack.c.l.b16 %v507
        %v1187 = vunpack.c.h.b16 %v507
        %v1188 = vunpack.c.l.b16 %v508
        %v1189 = vunpack.c.h.b16 %v508
        %v1190 = vunpack.c.l.b16 %v509
        %v1191 = vunpack.c.h.b16 %v509
        %v1192 = vunpack.c.l.b16 %v510
        %v1193 = vunpack.c.h.b16 %v510
        %v1194 = vunpack.c.l.b16 %v511
        %v1195 = vunpack.c.h.b16 %v511
        %v1196 = vunpack.c.l.b16 %v512
        %v1197 = vunpack.c.h.b16 %v512
        %v1198 = vunpack.c.l.b16 %v513
        %v1199 = vunpack.c.h.b16 %v513
        %v1200 = vunpack.c.l.b16 %v514
        %v1201 = vunpack.c.h.b16 %v514
        %v1202 = vunpack.c.l.b16 %v515
        %v1203 = vunpack.c.h.b16 %v515
        %v1204 = vunpack.c.l.b16 %v516
        %v1205 = vunpack.c.h.b16 %v516
        %v1206 = vunpack.c.l.b16 %v517
        %v1207 = vunpack.c.h.b16 %v517
        %v1208 = vunpack.c.l.b16 %v518
        %v1209 = vunpack.c.h.b16 %v518
        %v1210 = vunpack.c.l.b16 %v519
        %v1211 = vunpack.c.h.b16 %v519
        %v1212 = vunpack.c.l.b16 %v520
        %v1213 = vunpack.c.h.b16 %v520
        %v1214 = vunpack.c.l.b16 %v521
        %v1215 = vunpack.c.h.b16 %v521
        %v1216 = vunpack.c.l.b16 %v522
        %v1217 = vunpack.c.h.b16 %v522
        %v1218 = vunpack.c.l.b16 %v523
        %v1219 = vunpack.c.h.b16 %v523
        %v1220 = vunpack.c.l.b16 %v524
        %v1221 = vunpack.c.h.b16 %v524
        %v1222 = vunpack.c.l.b16 %v525
        %v1223 = vunpack.c.h.b16 %v525
        %v1224 = vunpack.c.l.b16 %v526
        %v1225 = vunpack.c.h.b16 %v526
        %v1226 = vunpack.c.l.b16 %v527
        %v1227 = vunpack.c.h.b16 %v527
        %v1228 = vunpack.c.l.b16 %v528
        %v1229 = vunpack.c.h.b16 %v528
        %v1230 = vunpack.c.l.b16 %v529
        %v1231 = vunpack.c.h.b16 %v529
        %v1232 = vunpack.c.l.b16 %v530
        %v1233 = vunpack.c.h.b16 %v530
        %v1234 = vunpack.c.l.b16 %v531
        %v1235 = vunpack.c.h.b16 %v531
        %v1236 = vunpack.c.l.b16 %v532
        %v1237 = vunpack.c.h.b16 %v532
        %v1238 = vunpack.c.l.b16 %v533
        %v1239 = vunpack.c.h.b16 %v533
        %v1240 = vunpack.c.l.b16 %v534
        %v1241 = vunpack.c.h.b16 %v534
        %v1242 = vunpack.c.l.b16 %v535
        %v1243 = vunpack.c.h.b16 %v535
        %v1244 = vunpack.c.l.b16 %v536
        %v1245 = vunpack.c.h.b16 %v536
        %v1246 = vunpack.c.l.b16 %v537
        %v1247 = vunpack.c.h.b16 %v537
        %v1248 = vunpack.c.l.b16 %v538
        %v1249 = vunpack.c.h.b16 %v538
        %v1250 = vunpack.c.l.b16 %v539
        %v1251 = vunpack.c.h.b16 %v539
        %v1252 = vunpack.c.l.b16 %v540
        %v1253 = vunpack.c.h.b16 %v540
        %v1254 = vunpack.c.l.b16 %v541
        %v1255 = vunpack.c.h.b16 %v541
        %v1256 = vunpack.c.l.b16 %v542
        %v1257 = vunpack.c.h.b16 %v542
        %v1258 = vunpack.c.l.b16 %v543
        %v1259 = vunpack.c.h.b16 %v543
        %v1260 = vunpack.c.l.b16 %v544
        %v1261 = vunpack.c.h.b16 %v544
        %v1262 = vunpack.c.l.b16 %v545
        %v1263 = vunpack.c.h.b16 %v545
        %v1264 = vunpack.c.l.b16 %v546
        %v1265 = vunpack.c.h.b16 %v546
        %v1266 = vunpack.c.l.b16 %v547
        %v1267 = vunpack.c.h.b16 %v547
        %v1268 = vunpack.c.l.b16 %v548
        %v1269 = vunpack.c.h.b16 %v548
        %v1270 = vunpack.c.l.b16 %v549
        %v1271 = vunpack.c.h.b16 %v549
        %v1272 = vunpack.c.l.b16 %v550
        %v1273 = vunpack.c.h.b16 %v550
        %v1274 = vunpack.c.l.b16 %v551
        %v1275 = vunpack.c.h.b16 %v551
        %v1276 = vunpack.c.l.b16 %v552
        %v1277 = vunpack.c.h.b16 %v552
        %v1278 = vunpack.c.l.b16 %v553
        %v1279 = vunpack.c.h.b16 %v553
        %v1280 = vunpack.c.l.b16 %v554
        %v1281 = vunpack.c.h.b16 %v554
        %v1282 = vunpack.c.l.b16 %v555
        %v1283 = vunpack.c.h.b16 %v555
        %v1284 = vunpack.c.l.b16 %v556
        %v1285 = vunpack.c.h.b16 %v556
        %v1286 = vunpack.c.l.b16 %v557
        %v1287 = vunpack.c.h.b16 %v557
        %v1288 = vunpack.c.l.b16 %v558
        %v1289 = vunpack.c.h.b16 %v558
        %v1290 = vunpack.c.l.b16 %v559
        %v1291 = vunpack.c.h.b16 %v559
        %v1292 = vunpack.c.l.b16 %v560
        %v1293 = vunpack.c.h.b16 %v560
        %v1294 = vunpack.c.l.b16 %v561
        %v1295 = vunpack.c.h.b16 %v561
        %v1296 = vunpack.c.l.b16 %v562
        %v1297 = vunpack.c.h.b16 %v562
        %v1298 = vunpack.c.l.b16 %v563
        %v1299 = vunpack.c.h.b16 %v563
        %v1300 = vunpack.c.l.b16 %v564
        %v1301 = vunpack.c.h.b16 %v564
        %v1302 = vunpack.c.l.b16 %v565
        %v1303 = vunpack.c.h.b16 %v565
        %v1304 = vunpack.c.l.b16 %v566
        %v1305 = vunpack.c.h.b16 %v566
        %v1306 = vunpack.c.l.b16 %v567
        %v1307 = vunpack.c.h.b16 %v567
        %v1308 = vunpack.c.l.b16 %v568
        %v1309 = vunpack.c.h.b16 %v568
        %v1310 = vunpack.c.l.b16 %v569
        %v1311 = vunpack.c.h.b16 %v569
        %v1312 = vunpack.c.l.b16 %v570
        %v1313 = vunpack.c.h.b16 %v570
        %v1314 = vunpack.c.l.b16 %v571
        %v1315 = vunpack.c.h.b16 %v571
        %v1316 = vunpack.c.l.b16 %v572
        %v1317 = vunpack.c.h.b16 %v572
        %v1318 = vunpack.c.l.b16 %v573
        %v1319 = vunpack.c.h.b16 %v573
        %v1320 = vunpack.c.l.b16 %v574
        %v1321 = vunpack.c.h.b16 %v574
        %v1322 = vunpack.c.l.b16 %v575
        %v1323 = vunpack.c.h.b16 %v575
        %v1324 = vunpack.c.l.b16 %v576
        %v1325 = vunpack.c.h.b16 %v576
        %v1326 = vunpack.c.l.b16 %v577
        %v1327 = vunpack.c.h.b16 %v577
        %v1328 = vunpack.c.l.b16 %v578
        %v1329 = vunpack.c.h.b16 %v578
        %v1330 = vunpack.c.l.b16 %v579
        %v1331 = vunpack.c.h.b16 %v579
        %v1332 = vunpack.c.l.b16 %v580
        %v1333 = vunpack.c.h.b16 %v580
        %v1334 = vunpack.c.l.b16 %v581
        %v1335 = vunpack.c.h.b16 %v581
        %v1336 = vunpack.c.l.b16 %v582
        %v1337 = vunpack.c.h.b16 %v582
        %v1338 = vunpack.c.l.b16 %v583
        %v1339 = vunpack.c.h.b16 %v583
        %v1340 = vunpack.c.l.b16 %v584
        %v1341 = vunpack.c.h.b16 %v584
        %v1342 = vunpack.c.l.b16 %v585
        %v1343 = vunpack.c.h.b16 %v585
        %v1344 = vunpack.c.l.b16 %v586
        %v1345 = vunpack.c.h.b16 %v586
        %v1346 = vunpack.c.l.b16 %v587
        %v1347 = vunpack.c.h.b16 %v587
        %v1348 = vunpack.c.l.b16 %v588
        %v1349 = vunpack.c.h.b16 %v588
        %v1350 = vunpack.c.l.b16 %v589
        %v1351 = vunpack.c.h.b16 %v589
        %v1352 = vunpack.c.l.b16 %v590
        %v1353 = vunpack.c.h.b16 %v590
        %v1354 = vunpack.c.l.b16 %v591
        %v1355 = vunpack.c.h.b16 %v591
        %v1356 = vunpack.c.l.b16 %v592
        %v1357 = vunpack.c.h.b16 %v592
        %v1358 = vunpack.c.l.b16 %v593
        %v1359 = vunpack.c.h.b16 %v593
        %v1360 = vunpack.c.l.b16 %v594
        %v1361 = vunpack.c.h.b16 %v594
        %v1362 = vunpack.c.l.b16 %v595
        %v1363 = vunpack.c.h.b16 %v595
        %v1364 = vunpack.c.l.b16 %v596
        %v1365 = vunpack.c.h.b16 %v596
        %v1366 = vunpack.c.l.b16 %v597
        %v1367 = vunpack.c.h.b16 %v597
        %v1368 = vunpack.c.l.b16 %v598
        %v1369 = vunpack.c.h.b16 %v598
        %v1370 = vunpack.c.l.b16 %v599
        %v1371 = vunpack.c.h.b16 %v599
        %v1372 = vunpack.c.l.b16 %v600
        %v1373 = vunpack.c.h.b16 %v600
        %v1374 = vunpack.c.l.b16 %v601
        %v1375 = vunpack.c.h.b16 %v601
        %v1376 = vunpack.c.l.b16 %v602
        %v1377 = vunpack.c.h.b16 %v602
        %v1378 = vunpack.c.l.b16 %v603
        %v1379 = vunpack.c.h.b16 %v603
        %v1380 = vunpack.c.l.b16 %v604
        %v1381 = vunpack.c.h.b16 %v604
        %v1382 = vunpack.c.l.b16 %v605
        %v1383 = vunpack.c.h.b16 %v605
        %v1384 = vunpack.c.l.b16 %v606
        %v1385 = vunpack.c.h.b16 %v606
        %v1386 = vunpack.c.l.b16 %v607
        %v1387 = vunpack.c.h.b16 %v607
        %v1388 = vunpack.c.l.b16 %v608
        %v1389 = vunpack.c.h.b16 %v608
        %v1390 = vunpack.c.l.b16 %v609
        %v1391 = vunpack.c.h.b16 %v609
        %v1392 = vunpack.c.l.b16 %v610
        %v1393 = vunpack.c.h.b16 %v610
        %v1394 = vunpack.c.l.b16 %v611
        %v1395 = vunpack.c.h.b16 %v611
        %v1396 = vunpack.c.l.b16 %v612
        %v1397 = vunpack.c.h.b16 %v612
        %v1398 = vunpack.c.l.b16 %v613
        %v1399 = vunpack.c.h.b16 %v613
        %v1400 = vunpack.c.l.b16 %v614
        %v1401 = vunpack.c.h.b16 %v614
        %v1402 = vunpack.c.l.b16 %v615
        %v1403 = vunpack.c.h.b16 %v615
        %v1404 = vunpack.c.l.b16 %v616
        %v1405 = vunpack.c.h.b16 %v616
        %v1406 = vunpack.c.l.b16 %v617
        %v1407 = vunpack.c.h.b16 %v617
        %v1408 = vunpack.c.l.b16 %v618
        %v1409 = vunpack.c.h.b16 %v618
        %v1410 = vunpack.c.l.b16 %v619
        %v1411 = vunpack.c.h.b16 %v619
        %v1412 = vunpack.c.l.b16 %v620
        %v1413 = vunpack.c.h.b16 %v620
        %v1414 = vunpack.c.l.b16 %v621
        %v1415 = vunpack.c.h.b16 %v621
        %v1416 = vunpack.c.l.b16 %v622
        %v1417 = vunpack.c.h.b16 %v622
        %v1418 = vunpack.c.l.b16 %v623
        %v1419 = vunpack.c.h.b16 %v623
        %v1420 = vpack.c.b16 %v912, %v908
        %v1421 = vpack.c.b16 %v913, %v909
        %v1422 = vpack.c.b16 %v914, %v910
        %v1423 = vpack.c.b16 %v915, %v911
        %v1424 = vpack.c.b16 %v920, %v916
        %v1425 = vpack.c.b16 %v921, %v917
        %v1426 = vpack.c.b16 %v922, %v918
        %v1427 = vpack.c.b16 %v923, %v919
        %v1428 = vpack.c.b16 %v928, %v924
        %v1429 = vpack.c.b16 %v929, %v925
        %v1430 = vpack.c.b16 %v930, %v926
        %v1431 = vpack.c.b16 %v931, %v927
        %v1432 = vpack.c.b16 %v936, %v932
        %v1433 = vpack.c.b16 %v937, %v933
        %v1434 = vpack.c.b16 %v938, %v934
        %v1435 = vpack.c.b16 %v939, %v935
        %v1436 = vpack.c.b16 %v944, %v940
        %v1437 = vpack.c.b16 %v945, %v941
        %v1438 = vpack.c.b16 %v946, %v942
        %v1439 = vpack.c.b16 %v947, %v943
        %v1440 = vpack.c.b16 %v952, %v948
        %v1441 = vpack.c.b16 %v953, %v949
        %v1442 = vpack.c.b16 %v954, %v950
        %v1443 = vpack.c.b16 %v955, %v951
        %v1444 = vpack.c.b16 %v960, %v956
        %v1445 = vpack.c.b16 %v961, %v957
        %v1446 = vpack.c.b16 %v962, %v958
        %v1447 = vpack.c.b16 %v963, %v959
        %v1448 = vpack.c.b16 %v968, %v964
        %v1449 = vpack.c.b16 %v969, %v965
        %v1450 = vpack.c.b16 %v970, %v966
        %v1451 = vpack.c.b16 %v971, %v967
        %v1452 = vpack.c.b16 %v976, %v972
        %v1453 = vpack.c.b16 %v977, %v973
        %v1454 = vpack.c.b16 %v978, %v974
        %v1455 = vpack.c.b16 %v979, %v975
        %v1456 = vpack.c.b16 %v984, %v980
        %v1457 = vpack.c.b16 %v985, %v981
        %v1458 = vpack.c.b16 %v986, %v982
        %v1459 = vpack.c.b16 %v987, %v983
        %v1460 = vpack.c.b16 %v992, %v988
        %v1461 = vpack.c.b16 %v993, %v989
        %v1462 = vpack.c.b16 %v994, %v990
        %v1463 = vpack.c.b16 %v995, %v991
        %v1464 = vpack.c.b16 %v1000, %v996
        %v1465 = vpack.c.b16 %v1001, %v997
        %v1466 = vpack.c.b16 %v1002, %v998
        %v1467 = vpack.c.b16 %v1003, %v999
        %v1468 = vpack.c.b16 %v1008, %v1004
        %v1469 = vpack.c.b16 %v1009, %v1005
        %v1470 = vpack.c.b16 %v1010, %v1006
        %v1471 = vpack.c.b16 %v1011, %v1007
        %v1472 = vpack.c.b16 %v1016, %v1012
        %v1473 = vpack.c.b16 %v1017, %v1013
        %v1474 = vpack.c.b16 %v1018, %v1014
        %v1475 = vpack.c.b16 %v1019, %v1015
        %v1476 = vpack.c.b16 %v1024, %v1020
        %v1477 = vpack.c.b16 %v1025, %v1021
        %v1478 = vpack.c.b16 %v1026, %v1022
        %v1479 = vpack.c.b16 %v1027, %v1023
        %v1480 = vpack.c.b16 %v1032, %v1028
        %v1481 = vpack.c.b16 %v1033, %v1029
        %v1482 = vpack.c.b16 %v1034, %v1030
        %v1483 = vpack.c.b16 %v1035, %v1031
        %v1484 = vpack.c.b16 %v1040, %v1036
        %v1485 = vpack.c.b16 %v1041, %v1037
        %v1486 = vpack.c.b16 %v1042, %v1038
        %v1487 = vpack.c.b16 %v1043, %v1039
        %v1488 = vpack.c.b16 %v1048, %v1044
        %v1489 = vpack.c.b16 %v1049, %v1045
        %v1490 = vpack.c.b16 %v1050, %v1046
        %v1491 = vpack.c.b16 %v1051, %v1047
        %v1492 = vpack.c.b16 %v1056, %v1052
        %v1493 = vpack.c.b16 %v1057, %v1053
        %v1494 = vpack.c.b16 %v1058, %v1054
        %v1495 = vpack.c.b16 %v1059, %v1055
        %v1496 = vpack.c.b16 %v1064, %v1060
        %v1497 = vpack.c.b16 %v1065, %v1061
        %v1498 = vpack.c.b16 %v1066, %v1062
        %v1499 = vpack.c.b16 %v1067, %v1063
        %v1500 = vpack.c.b16 %v1072, %v1068
        %v1501 = vpack.c.b16 %v1073, %v1069
        %v1502 = vpack.c.b16 %v1074, %v1070
        %v1503 = vpack.c.b16 %v1075, %v1071
        %v1504 = vpack.c.b16 %v1080, %v1076
        %v1505 = vpack.c.b16 %v1081, %v1077
        %v1506 = vpack.c.b16 %v1082, %v1078
        %v1507 = vpack.c.b16 %v1083, %v1079
        %v1508 = vpack.c.b16 %v1088, %v1084
        %v1509 = vpack.c.b16 %v1089, %v1085
        %v1510 = vpack.c.b16 %v1090, %v1086
        %v1511 = vpack.c.b16 %v1091, %v1087
        %v1512 = vpack.c.b16 %v1096, %v1092
        %v1513 = vpack.c.b16 %v1097, %v1093
        %v1514 = vpack.c.b16 %v1098, %v1094
        %v1515 = vpack.c.b16 %v1099, %v1095
        %v1516 = vpack.c.b16 %v1104, %v1100
        %v1517 = vpack.c.b16 %v1105, %v1101
        %v1518 = vpack.c.b16 %v1106, %v1102
        %v1519 = vpack.c.b16 %v1107, %v1103
        %v1520 = vpack.c.b16 %v1112, %v1108
        %v1521 = vpack.c.b16 %v1113, %v1109
        %v1522 = vpack.c.b16 %v1114, %v1110
        %v1523 = vpack.c.b16 %v1115, %v1111
        %v1524 = vpack.c.b16 %v1120, %v1116
        %v1525 = vpack.c.b16 %v1121, %v1117
        %v1526 = vpack.c.b16 %v1122, %v1118
        %v1527 = vpack.c.b16 %v1123, %v1119
        %v1528 = vpack.c.b16 %v1128, %v1124
        %v1529 = vpack.c.b16 %v1129, %v1125
        %v1530 = vpack.c.b16 %v1130, %v1126
        %v1531 = vpack.c.b16 %v1131, %v1127
        %v1532 = vpack.c.b16 %v1136, %v1132
        %v1533 = vpack.c.b16 %v1137, %v1133
        %v1534 = vpack.c.b16 %v1138, %v1134
        %v1535 = vpack.c.b16 %v1139, %v1135
        %v1536 = vpack.c.b16 %v1144, %v1140
        %v1537 = vpack.c.b16 %v1145, %v1141
        %v1538 = vpack.c.b16 %v1146, %v1142
        %v1539 = vpack.c.b16 %v1147, %v1143
        %v1540 = vpack.c.b16 %v1152, %v1148
        %v1541 = vpack.c.b16 %v1153, %v1149
        %v1542 = vpack.c.b16 %v1154, %v1150
        %v1543 = vpack.c.b16 %v1155, %v1151
        %v1544 = vpack.c.b16 %v1160, %v1156
        %v1545 = vpack.c.b16 %v1161, %v1157
        %v1546 = vpack.c.b16 %v1162, %v1158
        %v1547 = vpack.c.b16 %v1163, %v1159
        %v1548 = vpack.c.b16 %v1168, %v1164
        %v1549 = vpack.c.b16 %v1169, %v1165
        %v1550 = vpack.c.b16 %v1170, %v1166
        %v1551 = vpack.c.b16 %v1171, %v1167
        %v1552 = vpack.c.b16 %v1176, %v1172
        %v1553 = vpack.c.b16 %v1177, %v1173
        %v1554 = vpack.c.b16 %v1178, %v1174
        %v1555 = vpack.c.b16 %v1179, %v1175
        %v1556 = vpack.c.b16 %v1184, %v1180
        %v1557 = vpack.c.b16 %v1185, %v1181
        %v1558 = vpack.c.b16 %v1186, %v1182
        %v1559 = vpack.c.b16 %v1187, %v1183
        %v1560 = vpack.c.b16 %v1192, %v1188
        %v1561 = vpack.c.b16 %v1193, %v1189
        %v1562 = vpack.c.b16 %v1194, %v1190
        %v1563 = vpack.c.b16 %v1195, %v1191
        %v1564 = vpack.c.b16 %v1200, %v1196
        %v1565 = vpack.c.b16 %v1201, %v1197
        %v1566 = vpack.c.b16 %v1202, %v1198
        %v1567 = vpack.c.b16 %v1203, %v1199
        %v1568 = vpack.c.b16 %v1208, %v1204
        %v1569 = vpack.c.b16 %v1209, %v1205
        %v1570 = vpack.c.b16 %v1210, %v1206
        %v1571 = vpack.c.b16 %v1211, %v1207
        %v1572 = vpack.c.b16 %v1216, %v1212
        %v1573 = vpack.c.b16 %v1217, %v1213
        %v1574 = vpack.c.b16 %v1218, %v1214
        %v1575 = vpack.c.b16 %v1219, %v1215
        %v1576 = vpack.c.b16 %v1224, %v1220
        %v1577 = vpack.c.b16 %v1225, %v1221
        %v1578 = vpack.c.b16 %v1226, %v1222
        %v1579 = vpack.c.b16 %v1227, %v1223
        %v1580 = vpack.c.b16 %v1232, %v1228
        %v1581 = vpack.c.b16 %v1233, %v1229
        %v1582 = vpack.c.b16 %v1234, %v1230
        %v1583 = vpack.c.b16 %v1235, %v1231
        %v1584 = vpack.c.b16 %v1240, %v1236
        %v1585 = vpack.c.b16 %v1241, %v1237
        %v1586 = vpack.c.b16 %v1242, %v1238
        %v1587 = vpack.c.b16 %v1243, %v1239
        %v1588 = vpack.c.b16 %v1248, %v1244
        %v1589 = vpack.c.b16 %v1249, %v1245
        %v1590 = vpack.c.b16 %v1250, %v1246
        %v1591 = vpack.c.b16 %v1251, %v1247
        %v1592 = vpack.c.b16 %v1256, %v1252
        %v1593 = vpack.c.b16 %v1257, %v1253
        %v1594 = vpack.c.b16 %v1258, %v1254
        %v1595 = vpack.c.b16 %v1259, %v1255
        %v1596 = vpack.c.b16 %v1264, %v1260
        %v1597 = vpack.c.b16 %v1265, %v1261
        %v1598 = vpack.c.b16 %v1266, %v1262
        %v1599 = vpack.c.b16 %v1267, %v1263
        %v1600 = vpack.c.b16 %v1272, %v1268
        %v1601 = vpack.c.b16 %v1273, %v1269
        %v1602 = vpack.c.b16 %v1274, %v1270
        %v1603 = vpack.c.b16 %v1275, %v1271
        %v1604 = vpack.c.b16 %v1280, %v1276
        %v1605 = vpack.c.b16 %v1281, %v1277
        %v1606 = vpack.c.b16 %v1282, %v1278
        %v1607 = vpack.c.b16 %v1283, %v1279
        %v1608 = vpack.c.b16 %v1288, %v1284
        %v1609 = vpack.c.b16 %v1289, %v1285
        %v1610 = vpack.c.b16 %v1290, %v1286
        %v1611 = vpack.c.b16 %v1291, %v1287
        %v1612 = vpack.c.b16 %v1296, %v1292
        %v1613 = vpack.c.b16 %v1297, %v1293
        %v1614 = vpack.c.b16 %v1298, %v1294
        %v1615 = vpack.c.b16 %v1299, %v1295
        %v1616 = vpack.c.b16 %v1304, %v1300
        %v1617 = vpack.c.b16 %v1305, %v1301
        %v1618 = vpack.c.b16 %v1306, %v1302
        %v1619 = vpack.c.b16 %v1307, %v1303
        %v1620 = vpack.c.b16 %v1312, %v1308
        %v1621 = vpack.c.b16 %v1313, %v1309
        %v1622 = vpack.c.b16 %v1314, %v1310
        %v1623 = vpack.c.b16 %v1315, %v1311
        %v1624 = vpack.c.b16 %v1320, %v1316
        %v1625 = vpack.c.b16 %v1321, %v1317
        %v1626 = vpack.c.b16 %v1322, %v1318
        %v1627 = vpack.c.b16 %v1323, %v1319
        %v1628 = vpack.c.b16 %v1328, %v1324
        %v1629 = vpack.c.b16 %v1329, %v1325
        %v1630 = vpack.c.b16 %v1330, %v1326
        %v1631 = vpack.c.b16 %v1331, %v1327
        %v1632 = vpack.c.b16 %v1336, %v1332
        %v1633 = vpack.c.b16 %v1337, %v1333
        %v1634 = vpack.c.b16 %v1338, %v1334
        %v1635 = vpack.c.b16 %v1339, %v1335
        %v1636 = vpack.c.b16 %v1344, %v1340
        %v1637 = vpack.c.b16 %v1345, %v1341
        %v1638 = vpack.c.b16 %v1346, %v1342
        %v1639 = vpack.c.b16 %v1347, %v1343
        %v1640 = vpack.c.b16 %v1352, %v1348
        %v1641 = vpack.c.b16 %v1353, %v1349
        %v1642 = vpack.c.b16 %v1354, %v1350
        %v1643 = vpack.c.b16 %v1355, %v1351
        %v1644 = vpack.c.b16 %v1360, %v1356
        %v1645 = vpack.c.b16 %v1361, %v1357
        %v1646 = vpack.c.b16 %v1362, %v1358
        %v1647 = vpack.c.b16 %v1363, %v1359
        %v1648 = vpack.c.b16 %v1368, %v1364
        %v1649 = vpack.c.b16 %v1369, %v1365
        %v1650 = vpack.c.b16 %v1370, %v1366
        %v1651 = vpack.c.b16 %v1371, %v1367
        %v1652 = vpack.c.b16 %v1376, %v1372
        %v1653 = vpack.c.b16 %v1377, %v1373
        %v1654 = vpack.c.b16 %v1378, %v1374
        %v1655 = vpack.c.b16 %v1379, %v1375
        %v1656 = vpack.c.b16 %v1384, %v1380
        %v1657 = vpack.c.b16 %v1385, %v1381
        %v1658 = vpack.c.b16 %v1386, %v1382
        %v1659 = vpack.c.b16 %v1387, %v1383
        %v1660 = vpack.c.b16 %v1392, %v1388
        %v1661 = vpack.c.b16 %v1393, %v1389
        %v1662 = vpack.c.b16 %v1394, %v1390
        %v1663 = vpack.c.b16 %v1395, %v1391
        %v1664 = vpack.c.b16 %v1400, %v1396
        %v1665 = vpack.c.b16 %v1401, %v1397
        %v1666 = vpack.c.b16 %v1402, %v1398
        %v1667 = vpack.c.b16 %v1403, %v1399
        %v1668 = vpack.c.b16 %v1408, %v1404
        %v1669 = vpack.c.b16 %v1409, %v1405
        %v1670 = vpack.c.b16 %v1410, %v1406
        %v1671 = vpack.c.b16 %v1411, %v1407
        %v1672 = vpack.c.b16 %v1416, %v1412
        %v1673 = vpack.c.b16 %v1417, %v1413
        %v1674 = vpack.c.b16 %v1418, %v1414
        %v1675 = vpack.c.b16 %v1419, %v1415
        %1932 = vmatprep.subr.bf16.mxu0 %v1421
        %1933 = vmatpush1.bf16.msra.mxu0 %v1420
        %1934 = vmatprep.subr.bf16.mxu0 %v1425
        %1935 = vmatpush1.bf16.msra.mxu0 %v1424
        %1936 = vmatprep.subr.bf16.mxu0 %v1429
        %1937 = vmatpush1.bf16.msra.mxu0 %v1428
        %1938 = vmatprep.subr.bf16.mxu0 %v1433
        %1939 = vmatpush1.bf16.msra.mxu0 %v1432
        %1940 = vmatprep.subr.bf16.mxu0 %v1437
        %1941 = vmatpush1.bf16.msra.mxu0 %v1436
        %1942 = vmatprep.subr.bf16.mxu0 %v1441
        %1943 = vmatpush1.bf16.msra.mxu0 %v1440
        %1944 = vmatprep.subr.bf16.mxu0 %v1445
        %1945 = vmatpush1.bf16.msra.mxu0 %v1444
        %1946 = vmatprep.subr.bf16.mxu0 %v1449
        %1947 = vmatpush1.bf16.msra.mxu0 %v1448
        %1948 = vmatprep.subr.bf16.mxu0 %v1453
        %1949 = vmatpush1.bf16.msra.mxu0 %v1452
        %1950 = vmatprep.subr.bf16.mxu0 %v1457
        %1951 = vmatpush1.bf16.msra.mxu0 %v1456
        %1952 = vmatprep.subr.bf16.mxu0 %v1461
        %1953 = vmatpush1.bf16.msra.mxu0 %v1460
        %1954 = vmatprep.subr.bf16.mxu0 %v1465
        %1955 = vmatpush1.bf16.msra.mxu0 %v1464
        %1956 = vmatprep.subr.bf16.mxu0 %v1469
        %1957 = vmatpush1.bf16.msra.mxu0 %v1468
        %1958 = vmatprep.subr.bf16.mxu0 %v1473
        %1959 = vmatpush1.bf16.msra.mxu0 %v1472
        %1960 = vmatprep.subr.bf16.mxu0 %v1477
        %1961 = vmatpush1.bf16.msra.mxu0 %v1476
        %1962 = vmatprep.subr.bf16.mxu0 %v1481
        %1963 = vmatpush1.bf16.msra.mxu0 %v1480
        %1964 = vmatprep.mubr.bf16.mxu0 %v637
        %1965 = vmatmul.mubr.bf16.gmra.mrb[0].mxu0 %v636
        %v1966 = vpop.f32.mrb[0].mxu0
        %v1967 = vadd.f32 0.0, %v1966
        %v1968 = vpop.f32.mrb[0].mxu0
        %v1969 = vadd.f32 0.0, %v1968
        %v1970 = vpop.f32.mrb[0].mxu0
        %v1971 = vpop.f32.mrb[0].mxu0
        %1972 = vdwg.mxu0
        %1973 = vmatprep.subr.bf16.mxu0 %v1485
        %1974 = vmatpush1.bf16.msra.mxu0 %v1484
        %1975 = vmatprep.subr.bf16.mxu0 %v1489
        %1976 = vmatpush1.bf16.msra.mxu0 %v1488
        %1977 = vmatprep.subr.bf16.mxu0 %v1493
        %1978 = vmatpush1.bf16.msra.mxu0 %v1492
        %1979 = vmatprep.subr.bf16.mxu0 %v1497
        %1980 = vmatpush1.bf16.msra.mxu0 %v1496
        %1981 = vmatprep.subr.bf16.mxu0 %v1501
        %1982 = vmatpush1.bf16.msra.mxu0 %v1500
        %1983 = vmatprep.subr.bf16.mxu0 %v1505
        %1984 = vmatpush1.bf16.msra.mxu0 %v1504
        %1985 = vmatprep.subr.bf16.mxu0 %v1509
        %1986 = vmatpush1.bf16.msra.mxu0 %v1508
        %1987 = vmatprep.subr.bf16.mxu0 %v1513
        %1988 = vmatpush1.bf16.msra.mxu0 %v1512
        %1989 = vmatprep.subr.bf16.mxu0 %v1517
        %1990 = vmatpush1.bf16.msra.mxu0 %v1516
        %1991 = vmatprep.subr.bf16.mxu0 %v1521
        %1992 = vmatpush1.bf16.msra.mxu0 %v1520
        %1993 = vmatprep.subr.bf16.mxu0 %v1525
        %1994 = vmatpush1.bf16.msra.mxu0 %v1524
        %1995 = vmatprep.subr.bf16.mxu0 %v1529
        %1996 = vmatpush1.bf16.msra.mxu0 %v1528
        %1997 = vmatprep.subr.bf16.mxu0 %v1533
        %1998 = vmatpush1.bf16.msra.mxu0 %v1532
        %1999 = vmatprep.subr.bf16.mxu0 %v1537
        %2000 = vmatpush1.bf16.msra.mxu0 %v1536
        %2001 = vmatprep.subr.bf16.mxu0 %v1541
        %2002 = vmatpush1.bf16.msra.mxu0 %v1540
        %2003 = vmatprep.subr.bf16.mxu0 %v1545
        %2004 = vmatpush1.bf16.msra.mxu0 %v1544
        %2005 = vmatprep.mubr.bf16.mxu0 %v639
        %2006 = vmatmul.mubr.bf16.gmra.mrb[0].mxu0 %v638
        %v2007 = vpop.f32.mrb[0].mxu0
        %v2008 = vadd.f32 %v1967, %v2007
        %v2009 = vpop.f32.mrb[0].mxu0
        %v2010 = vadd.f32 %v1969, %v2009
        %v2011 = vpop.f32.mrb[0].mxu0
        %v2012 = vpop.f32.mrb[0].mxu0
        %2013 = vdwg.mxu0
        %2014 = vmatprep.subr.bf16.mxu0 %v1549
        %2015 = vmatpush1.bf16.msra.mxu0 %v1548
        %2016 = vmatprep.subr.bf16.mxu0 %v1553
        %2017 = vmatpush1.bf16.msra.mxu0 %v1552
        %2018 = vmatprep.subr.bf16.mxu0 %v1557
        %2019 = vmatpush1.bf16.msra.mxu0 %v1556
        %2020 = vmatprep.subr.bf16.mxu0 %v1561
        %2021 = vmatpush1.bf16.msra.mxu0 %v1560
        %2022 = vmatprep.subr.bf16.mxu0 %v1565
        %2023 = vmatpush1.bf16.msra.mxu0 %v1564
        %2024 = vmatprep.subr.bf16.mxu0 %v1569
        %2025 = vmatpush1.bf16.msra.mxu0 %v1568
        %2026 = vmatprep.subr.bf16.mxu0 %v1573
        %2027 = vmatpush1.bf16.msra.mxu0 %v1572
        %2028 = vmatprep.subr.bf16.mxu0 %v1577
        %2029 = vmatpush1.bf16.msra.mxu0 %v1576
        %2030 = vmatprep.subr.bf16.mxu0 %v1581
        %2031 = vmatpush1.bf16.msra.mxu0 %v1580
        %2032 = vmatprep.subr.bf16.mxu0 %v1585
        %2033 = vmatpush1.bf16.msra.mxu0 %v1584
        %2034 = vmatprep.subr.bf16.mxu0 %v1589
        %2035 = vmatpush1.bf16.msra.mxu0 %v1588
        %2036 = vmatprep.subr.bf16.mxu0 %v1593
        %2037 = vmatpush1.bf16.msra.mxu0 %v1592
        %2038 = vmatprep.subr.bf16.mxu0 %v1597
        %2039 = vmatpush1.bf16.msra.mxu0 %v1596
        %2040 = vmatprep.subr.bf16.mxu0 %v1601
        %2041 = vmatpush1.bf16.msra.mxu0 %v1600
        %2042 = vmatprep.subr.bf16.mxu0 %v1605
        %2043 = vmatpush1.bf16.msra.mxu0 %v1604
        %2044 = vmatprep.subr.bf16.mxu0 %v1609
        %2045 = vmatpush1.bf16.msra.mxu0 %v1608
        %2046 = vmatprep.mubr.bf16.mxu0 %v641
        %2047 = vmatmul.mubr.bf16.gmra.mrb[0].mxu0 %v640
        %v2048 = vpop.f32.mrb[0].mxu0
        %v2049 = vadd.f32 %v2008, %v2048
        %v2050 = vpop.f32.mrb[0].mxu0
        %v2051 = vadd.f32 %v2010, %v2050
        %v2052 = vpop.f32.mrb[0].mxu0
        %v2053 = vpop.f32.mrb[0].mxu0
        %2054 = vdwg.mxu0
        %2055 = vmatprep.subr.bf16.mxu0 %v1613
        %2056 = vmatpush1.bf16.msra.mxu0 %v1612
        %2057 = vmatprep.subr.bf16.mxu0 %v1617
        %2058 = vmatpush1.bf16.msra.mxu0 %v1616
        %2059 = vmatprep.subr.bf16.mxu0 %v1621
        %2060 = vmatpush1.bf16.msra.mxu0 %v1620
        %2061 = vmatprep.subr.bf16.mxu0 %v1625
        %2062 = vmatpush1.bf16.msra.mxu0 %v1624
        %2063 = vmatprep.subr.bf16.mxu0 %v1629
        %2064 = vmatpush1.bf16.msra.mxu0 %v1628
        %2065 = vmatprep.subr.bf16.mxu0 %v1633
        %2066 = vmatpush1.bf16.msra.mxu0 %v1632
        %2067 = vmatprep.subr.bf16.mxu0 %v1637
        %2068 = vmatpush1.bf16.msra.mxu0 %v1636
        %2069 = vmatprep.subr.bf16.mxu0 %v1641
        %2070 = vmatpush1.bf16.msra.mxu0 %v1640
        %2071 = vmatprep.subr.bf16.mxu0 %v1645
        %2072 = vmatpush1.bf16.msra.mxu0 %v1644
        %2073 = vmatprep.subr.bf16.mxu0 %v1649
        %2074 = vmatpush1.bf16.msra.mxu0 %v1648
        %2075 = vmatprep.subr.bf16.mxu0 %v1653
        %2076 = vmatpush1.bf16.msra.mxu0 %v1652
        %2077 = vmatprep.subr.bf16.mxu0 %v1657
        %2078 = vmatpush1.bf16.msra.mxu0 %v1656
        %2079 = vmatprep.subr.bf16.mxu0 %v1661
        %2080 = vmatpush1.bf16.msra.mxu0 %v1660
        %2081 = vmatprep.subr.bf16.mxu0 %v1665
        %2082 = vmatpush1.bf16.msra.mxu0 %v1664
        %2083 = vmatprep.subr.bf16.mxu0 %v1669
        %2084 = vmatpush1.bf16.msra.mxu0 %v1668
        %2085 = vmatprep.subr.bf16.mxu0 %v1673
        %2086 = vmatpush1.bf16.msra.mxu0 %v1672
        %2087 = vmatprep.mubr.bf16.mxu0 %v643
        %2088 = vmatmul.mubr.bf16.gmra.mrb[0].mxu0 %v642
        %v2089 = vpop.f32.mrb[0].mxu0
        %v2090 = vadd.f32 %v2049, %v2089
        %v2091 = vpop.f32.mrb[0].mxu0
        %v2092 = vadd.f32 %v2051, %v2091
        %v2093 = vpop.f32.mrb[0].mxu0
        %v2094 = vpop.f32.mrb[0].mxu0
        %2095 = vdwg.mxu0
        %2096 = vmatprep.subr.bf16.mxu0 %v1423
        %2097 = vmatpush1.bf16.msra.mxu0 %v1422
        %2098 = vmatprep.subr.bf16.mxu0 %v1427
        %2099 = vmatpush1.bf16.msra.mxu0 %v1426
        %2100 = vmatprep.subr.bf16.mxu0 %v1431
        %2101 = vmatpush1.bf16.msra.mxu0 %v1430
        %2102 = vmatprep.subr.bf16.mxu0 %v1435
        %2103 = vmatpush1.bf16.msra.mxu0 %v1434
        %2104 = vmatprep.subr.bf16.mxu0 %v1439
        %2105 = vmatpush1.bf16.msra.mxu0 %v1438
        %2106 = vmatprep.subr.bf16.mxu0 %v1443
        %2107 = vmatpush1.bf16.msra.mxu0 %v1442
        %2108 = vmatprep.subr.bf16.mxu0 %v1447
        %2109 = vmatpush1.bf16.msra.mxu0 %v1446
        %2110 = vmatprep.subr.bf16.mxu0 %v1451
        %2111 = vmatpush1.bf16.msra.mxu0 %v1450
        %2112 = vmatprep.subr.bf16.mxu0 %v1455
        %2113 = vmatpush1.bf16.msra.mxu0 %v1454
        %2114 = vmatprep.subr.bf16.mxu0 %v1459
        %2115 = vmatpush1.bf16.msra.mxu0 %v1458
        %2116 = vmatprep.subr.bf16.mxu0 %v1463
        %2117 = vmatpush1.bf16.msra.mxu0 %v1462
        %2118 = vmatprep.subr.bf16.mxu0 %v1467
        %2119 = vmatpush1.bf16.msra.mxu0 %v1466
        %2120 = vmatprep.subr.bf16.mxu0 %v1471
        %2121 = vmatpush1.bf16.msra.mxu0 %v1470
        %2122 = vmatprep.subr.bf16.mxu0 %v1475
        %2123 = vmatpush1.bf16.msra.mxu0 %v1474
        %2124 = vmatprep.subr.bf16.mxu0 %v1479
        %2125 = vmatpush1.bf16.msra.mxu0 %v1478
        %2126 = vmatprep.subr.bf16.mxu0 %v1483
        %2127 = vmatpush1.bf16.msra.mxu0 %v1482
        %2128 = vmatprep.mubr.bf16.mxu0 %v637
        %2129 = vmatmul.mubr.bf16.gmra.mrb[0].mxu0 %v636
        %v2130 = vpop.f32.mrb[0].mxu0
        %v2131 = vadd.f32 0.0, %v2130
        %v2132 = vpop.f32.mrb[0].mxu0
        %v2133 = vadd.f32 0.0, %v2132
        %v2134 = vpop.f32.mrb[0].mxu0
        %v2135 = vpop.f32.mrb[0].mxu0
        %2136 = vdwg.mxu0
        %2137 = vmatprep.subr.bf16.mxu0 %v1487
        %2138 = vmatpush1.bf16.msra.mxu0 %v1486
        %2139 = vmatprep.subr.bf16.mxu0 %v1491
        %2140 = vmatpush1.bf16.msra.mxu0 %v1490
        %2141 = vmatprep.subr.bf16.mxu0 %v1495
        %2142 = vmatpush1.bf16.msra.mxu0 %v1494
        %2143 = vmatprep.subr.bf16.mxu0 %v1499
        %2144 = vmatpush1.bf16.msra.mxu0 %v1498
        %2145 = vmatprep.subr.bf16.mxu0 %v1503
        %2146 = vmatpush1.bf16.msra.mxu0 %v1502
        %2147 = vmatprep.subr.bf16.mxu0 %v1507
        %2148 = vmatpush1.bf16.msra.mxu0 %v1506
        %2149 = vmatprep.subr.bf16.mxu0 %v1511
        %2150 = vmatpush1.bf16.msra.mxu0 %v1510
        %2151 = vmatprep.subr.bf16.mxu0 %v1515
        %2152 = vmatpush1.bf16.msra.mxu0 %v1514
        %2153 = vmatprep.subr.bf16.mxu0 %v1519
        %2154 = vmatpush1.bf16.msra.mxu0 %v1518
        %2155 = vmatprep.subr.bf16.mxu0 %v1523
        %2156 = vmatpush1.bf16.msra.mxu0 %v1522
        %2157 = vmatprep.subr.bf16.mxu0 %v1527
        %2158 = vmatpush1.bf16.msra.mxu0 %v1526
        %2159 = vmatprep.subr.bf16.mxu0 %v1531
        %2160 = vmatpush1.bf16.msra.mxu0 %v1530
        %2161 = vmatprep.subr.bf16.mxu0 %v1535
        %2162 = vmatpush1.bf16.msra.mxu0 %v1534
        %2163 = vmatprep.subr.bf16.mxu0 %v1539
        %2164 = vmatpush1.bf16.msra.mxu0 %v1538
        %2165 = vmatprep.subr.bf16.mxu0 %v1543
        %2166 = vmatpush1.bf16.msra.mxu0 %v1542
        %2167 = vmatprep.subr.bf16.mxu0 %v1547
        %2168 = vmatpush1.bf16.msra.mxu0 %v1546
        %2169 = vmatprep.mubr.bf16.mxu0 %v639
        %2170 = vmatmul.mubr.bf16.gmra.mrb[0].mxu0 %v638
        %v2171 = vpop.f32.mrb[0].mxu0
        %v2172 = vadd.f32 %v2131, %v2171
        %v2173 = vpop.f32.mrb[0].mxu0
        %v2174 = vadd.f32 %v2133, %v2173
        %v2175 = vpop.f32.mrb[0].mxu0
        %v2176 = vpop.f32.mrb[0].mxu0
        %2177 = vdwg.mxu0
        %2178 = vmatprep.subr.bf16.mxu0 %v1551
        %2179 = vmatpush1.bf16.msra.mxu0 %v1550
        %2180 = vmatprep.subr.bf16.mxu0 %v1555
        %2181 = vmatpush1.bf16.msra.mxu0 %v1554
        %2182 = vmatprep.subr.bf16.mxu0 %v1559
        %2183 = vmatpush1.bf16.msra.mxu0 %v1558
        %2184 = vmatprep.subr.bf16.mxu0 %v1563
        %2185 = vmatpush1.bf16.msra.mxu0 %v1562
        %2186 = vmatprep.subr.bf16.mxu0 %v1567
        %2187 = vmatpush1.bf16.msra.mxu0 %v1566
        %2188 = vmatprep.subr.bf16.mxu0 %v1571
        %2189 = vmatpush1.bf16.msra.mxu0 %v1570
        %2190 = vmatprep.subr.bf16.mxu0 %v1575
        %2191 = vmatpush1.bf16.msra.mxu0 %v1574
        %2192 = vmatprep.subr.bf16.mxu0 %v1579
        %2193 = vmatpush1.bf16.msra.mxu0 %v1578
        %2194 = vmatprep.subr.bf16.mxu0 %v1583
        %2195 = vmatpush1.bf16.msra.mxu0 %v1582
        %2196 = vmatprep.subr.bf16.mxu0 %v1587
        %2197 = vmatpush1.bf16.msra.mxu0 %v1586
        %2198 = vmatprep.subr.bf16.mxu0 %v1591
        %2199 = vmatpush1.bf16.msra.mxu0 %v1590
        %2200 = vmatprep.subr.bf16.mxu0 %v1595
        %2201 = vmatpush1.bf16.msra.mxu0 %v1594
        %2202 = vmatprep.subr.bf16.mxu0 %v1599
        %2203 = vmatpush1.bf16.msra.mxu0 %v1598
        %2204 = vmatprep.subr.bf16.mxu0 %v1603
        %2205 = vmatpush1.bf16.msra.mxu0 %v1602
        %2206 = vmatprep.subr.bf16.mxu0 %v1607
        %2207 = vmatpush1.bf16.msra.mxu0 %v1606
        %2208 = vmatprep.subr.bf16.mxu0 %v1611
        %2209 = vmatpush1.bf16.msra.mxu0 %v1610
        %2210 = vmatprep.mubr.bf16.mxu0 %v641
        %2211 = vmatmul.mubr.bf16.gmra.mrb[0].mxu0 %v640
        %v2212 = vpop.f32.mrb[0].mxu0
        %v2213 = vadd.f32 %v2172, %v2212
        %v2214 = vpop.f32.mrb[0].mxu0
        %v2215 = vadd.f32 %v2174, %v2214
        %v2216 = vpop.f32.mrb[0].mxu0
        %v2217 = vpop.f32.mrb[0].mxu0
        %2218 = vdwg.mxu0
        %2219 = vmatprep.subr.bf16.mxu0 %v1615
        %2220 = vmatpush1.bf16.msra.mxu0 %v1614
        %2221 = vmatprep.subr.bf16.mxu0 %v1619
        %2222 = vmatpush1.bf16.msra.mxu0 %v1618
        %2223 = vmatprep.subr.bf16.mxu0 %v1623
        %2224 = vmatpush1.bf16.msra.mxu0 %v1622
        %2225 = vmatprep.subr.bf16.mxu0 %v1627
        %2226 = vmatpush1.bf16.msra.mxu0 %v1626
        %2227 = vmatprep.subr.bf16.mxu0 %v1631
        %2228 = vmatpush1.bf16.msra.mxu0 %v1630
        %2229 = vmatprep.subr.bf16.mxu0 %v1635
        %2230 = vmatpush1.bf16.msra.mxu0 %v1634
        %2231 = vmatprep.subr.bf16.mxu0 %v1639
        %2232 = vmatpush1.bf16.msra.mxu0 %v1638
        %2233 = vmatprep.subr.bf16.mxu0 %v1643
        %2234 = vmatpush1.bf16.msra.mxu0 %v1642
        %2235 = vmatprep.subr.bf16.mxu0 %v1647
        %2236 = vmatpush1.bf16.msra.mxu0 %v1646
        %2237 = vmatprep.subr.bf16.mxu0 %v1651
        %2238 = vmatpush1.bf16.msra.mxu0 %v1650
        %2239 = vmatprep.subr.bf16.mxu0 %v1655
        %2240 = vmatpush1.bf16.msra.mxu0 %v1654
        %2241 = vmatprep.subr.bf16.mxu0 %v1659
        %2242 = vmatpush1.bf16.msra.mxu0 %v1658
        %2243 = vmatprep.subr.bf16.mxu0 %v1663
        %2244 = vmatpush1.bf16.msra.mxu0 %v1662
        %2245 = vmatprep.subr.bf16.mxu0 %v1667
        %2246 = vmatpush1.bf16.msra.mxu0 %v1666
        %2247 = vmatprep.subr.bf16.mxu0 %v1671
        %2248 = vmatpush1.bf16.msra.mxu0 %v1670
        %2249 = vmatprep.subr.bf16.mxu0 %v1675
        %2250 = vmatpush1.bf16.msra.mxu0 %v1674
        %2251 = vmatprep.mubr.bf16.mxu0 %v643
        %2252 = vmatmul.mubr.bf16.gmra.mrb[0].mxu0 %v642
        %v2253 = vpop.f32.mrb[0].mxu0
        %v2254 = vadd.f32 %v2213, %v2253
        %v2255 = vpop.f32.mrb[0].mxu0
        %v2256 = vadd.f32 %v2215, %v2255
        %v2257 = vpop.f32.mrb[0].mxu0
        %v2258 = vpop.f32.mrb[0].mxu0
        %2259 = vdwg.mxu0
        %v2260 = vadd.f32 %v360, %v2090
        %v2261 = vadd.f32 %v361, %v2092
        %v2262 = vadd.f32 %v362, %v2254
        %v2263 = vadd.f32 %v363, %v2256
        %2264 = vst [vmem:[#allocation2] sm:$0xff] %v2260
        %2265 = vst [vmem:[#allocation2 + $0x8] sm:$0xff] %v2261
        %2266 = vst [vmem:[#allocation2 + $0x10] sm:$0xff] %v2262
        %2267 = vst [vmem:[#allocation2 + $0x18] sm:$0xff] %v2263
        %p2268 = scmp.eq.s32.totalorder %s26, 1
        // Predicated region
        $region73: #{tpu_custom_call.1} parent=43 // pred_check
          %p2269 = pneg %p2268
        $region74: #{tpu_custom_call.1} parent=43 // pred_check_branch
          %2271 = sbr.rel (%p2269) target = $region76
        $region75: #{tpu_custom_call.1} parent=43 // pred_region
          %v2272 = vld [vmem:[#allocation2] sm:$0xff]
          %v2273 = vld [vmem:[#allocation2 + $0x8] sm:$0xff]
          %v2274 = vld [vmem:[#allocation2 + $0x10] sm:$0xff]
          %v2275 = vld [vmem:[#allocation2 + $0x18] sm:$0xff]
          %v2276 = vrot.slane %v2272, 4
          %v2277 = vadd.f32 %v2272, %v2276
          %v2278 = vrot.slane %v2277, 2
          %v2279 = vadd.f32 %v2277, %v2278
          %v2280 = vrot.slane %v2279, 1
          %v2281 = vadd.f32 %v2279, %v2280
          %v2282 = vrot.slane %v2273, 4
          %v2283 = vadd.f32 %v2273, %v2282
          %v2284 = vrot.slane %v2283, 2
          %v2285 = vadd.f32 %v2283, %v2284
          %v2286 = vrot.slane %v2285, 1
          %v2287 = vadd.f32 %v2285, %v2286
          %v2288 = vrot.slane %v2274, 4
          %v2289 = vadd.f32 %v2274, %v2288
          %v2290 = vrot.slane %v2289, 2
          %v2291 = vadd.f32 %v2289, %v2290
          %v2292 = vrot.slane %v2291, 1
          %v2293 = vadd.f32 %v2291, %v2292
          %v2294 = vrot.slane %v2275, 4
          %v2295 = vadd.f32 %v2275, %v2294
          %v2296 = vrot.slane %v2295, 2
          %v2297 = vadd.f32 %v2295, %v2296
          %v2298 = vrot.slane %v2297, 1
          %v2299 = vadd.f32 %v2297, %v2298
          %v2300 = vmul.f32 %v2281, 0.125
          %v2301 = vmul.f32 %v2287, 0.125
          %v2302 = vmul.f32 %v2293, 0.125
          %v2303 = vmul.f32 %v2299, 0.125
          %v2304 = vsub.f32 %v2272, %v2300
          %v2305 = vsub.f32 %v2273, %v2301
          %v2306 = vsub.f32 %v2274, %v2302
          %v2307 = vsub.f32 %v2275, %v2303
          %v2308 = vmul.f32 %v2304, %v2304
          %v2309 = vmul.f32 %v2305, %v2305
          %v2310 = vmul.f32 %v2306, %v2306
          %v2311 = vmul.f32 %v2307, %v2307
          %v2312 = vrot.slane %v2308, 4
          %v2313 = vadd.f32 %v2308, %v2312
          %v2314 = vrot.slane %v2313, 2
          %v2315 = vadd.f32 %v2313, %v2314
          %v2316 = vrot.slane %v2315, 1
          %v2317 = vadd.f32 %v2315, %v2316
          %v2318 = vrot.slane %v2309, 4
          %v2319 = vadd.f32 %v2309, %v2318
          %v2320 = vrot.slane %v2319, 2
          %v2321 = vadd.f32 %v2319, %v2320
          %v2322 = vrot.slane %v2321, 1
          %v2323 = vadd.f32 %v2321, %v2322
          %v2324 = vrot.slane %v2310, 4
          %v2325 = vadd.f32 %v2310, %v2324
          %v2326 = vrot.slane %v2325, 2
          %v2327 = vadd.f32 %v2325, %v2326
          %v2328 = vrot.slane %v2327, 1
          %v2329 = vadd.f32 %v2327, %v2328
          %v2330 = vrot.slane %v2311, 4
          %v2331 = vadd.f32 %v2311, %v2330
          %v2332 = vrot.slane %v2331, 2
          %v2333 = vadd.f32 %v2331, %v2332
          %v2334 = vrot.slane %v2333, 1
          %v2335 = vadd.f32 %v2333, %v2334
          %v2336 = vmul.f32 %v2317, 0.125
          %v2337 = vmul.f32 %v2323, 0.125
          %v2338 = vmul.f32 %v2329, 0.125
          %v2339 = vmul.f32 %v2335, 0.125
          %v2340 = vadd.f32 %v2336, 1e-05
          %v2341 = vadd.f32 %v2337, 1e-05
          %v2342 = vadd.f32 %v2338, 1e-05
          %v2343 = vadd.f32 %v2339, 1e-05
          %v2344 = vrsqrt.pop %v2340
          %v2345 = vrsqrt.pop %v2341
          %v2346 = vrsqrt.pop %v2342
          %v2347 = vrsqrt.pop %v2343
          %v2348 = vld [vmem:[#allocation8] sm:$0xf]
          %v2350 = vlaneseq
          %v2351 = vshrl.u32 %v2350, 7
          %v2352 = vsub.s32 0, %v2351
          %v2353 = vrot.slane %v2348, %v2352
          %v2354 = vlaneseq
          %v2355 = vshrl.u32 %v2354, 7
          %v2356 = vsub.s32 1, %v2355
          %v2357 = vrot.slane %v2348, %v2356
          %v2358 = vlaneseq
          %v2359 = vshrl.u32 %v2358, 7
          %v2360 = vsub.s32 2, %v2359
          %v2361 = vrot.slane %v2348, %v2360
          %v2362 = vlaneseq
          %v2363 = vshrl.u32 %v2362, 7
          %v2364 = vsub.s32 3, %v2363
          %v2365 = vrot.slane %v2348, %v2364
          %v2370 = vmul.f32 %v2344, %v2353
          %v2371 = vmul.f32 %v2345, %v2357
          %v2372 = vmul.f32 %v2346, %v2361
          %v2373 = vmul.f32 %v2347, %v2365
          %v2374 = vlaneseq
          %v2375 = vshrl.u32 %v2374, 7
          %v2376 = vsub.s32 0, %v2375
          %v2377 = vrot.slane %v2370, %v2376
          %v2378 = vlaneseq
          %v2379 = vshrl.u32 %v2378, 7
          %v2380 = vsub.s32 0, %v2379
          %v2381 = vrot.slane %v2371, %v2380
          %v2382 = vlaneseq
          %v2383 = vshrl.u32 %v2382, 7
          %v2384 = vsub.s32 0, %v2383
          %v2385 = vrot.slane %v2372, %v2384
          %v2386 = vlaneseq
          %v2387 = vshrl.u32 %v2386, 7
          %v2388 = vsub.s32 0, %v2387
          %v2389 = vrot.slane %v2373, %v2388
          %v2390 = vmul.f32 %v2304, %v2377
          %v2391 = vmul.f32 %v2305, %v2381
          %v2392 = vmul.f32 %v2306, %v2385
          %v2393 = vmul.f32 %v2307, %v2389
          %v2394 = vld [vmem:[#allocation9] sm:$0xf]
          %v2396 = vlaneseq
          %v2397 = vshrl.u32 %v2396, 7
          %v2398 = vsub.s32 0, %v2397
          %v2399 = vrot.slane %v2394, %v2398
          %v2400 = vlaneseq
          %v2401 = vshrl.u32 %v2400, 7
          %v2402 = vsub.s32 1, %v2401
          %v2403 = vrot.slane %v2394, %v2402
          %v2404 = vlaneseq
          %v2405 = vshrl.u32 %v2404, 7
          %v2406 = vsub.s32 2, %v2405
          %v2407 = vrot.slane %v2394, %v2406
          %v2408 = vlaneseq
          %v2409 = vshrl.u32 %v2408, 7
          %v2410 = vsub.s32 3, %v2409
          %v2411 = vrot.slane %v2394, %v2410
          %v2416 = vadd.f32 %v2390, %v2399
          %v2417 = vadd.f32 %v2391, %v2403
          %v2418 = vadd.f32 %v2392, %v2407
          %v2419 = vadd.f32 %v2393, %v2411
          %vm2420 = vcmp.ge.f32.partialorder %v2416, 0.0
          %vm2421 = vcmp.ge.f32.partialorder %v2417, 0.0
          %vm2422 = vcmp.ge.f32.partialorder %v2418, 0.0
          %vm2423 = vcmp.ge.f32.partialorder %v2419, 0.0
          %v2424 = vmul.f32 %v2416, 0.01
          %v2425 = vmul.f32 %v2417, 0.01
          %v2426 = vmul.f32 %v2418, 0.01
          %v2427 = vmul.f32 %v2419, 0.01
          %v2428 = vsel %vm2420, %v2416, %v2424
          %v2429 = vsel %vm2421, %v2417, %v2425
          %v2430 = vsel %vm2422, %v2418, %v2426
          %v2431 = vsel %vm2423, %v2419, %v2427
          %v2432 = vpack.c.bf16 %v2428, %v2428
          %v2433 = vpack.c.bf16 %v2429, %v2429
          %v2434 = vpack.c.bf16 %v2430, %v2430
          %v2435 = vpack.c.bf16 %v2431, %v2431
          %v2436 = vld [vmem:[#allocation11] sm:$0xf]
          %v2437 = vld [vmem:[#allocation11 + $0x4] sm:$0xf]
          %v2438 = vld [vmem:[#allocation11 + $0x8] sm:$0xf]
          %v2439 = vld [vmem:[#allocation11 + $0xc] sm:$0xf]
          %v2440 = vld [vmem:[#allocation11 + $0x10] sm:$0xf]
          %v2441 = vld [vmem:[#allocation11 + $0x14] sm:$0xf]
          %v2442 = vld [vmem:[#allocation11 + $0x18] sm:$0xf]
          %v2443 = vld [vmem:[#allocation11 + $0x1c] sm:$0xf]
          %v2444 = vld [vmem:[#allocation11 + $0x20] sm:$0xf]
          %v2445 = vld [vmem:[#allocation11 + $0x24] sm:$0xf]
          %v2446 = vld [vmem:[#allocation11 + $0x28] sm:$0xf]
          %v2447 = vld [vmem:[#allocation11 + $0x2c] sm:$0xf]
          %v2448 = vld [vmem:[#allocation11 + $0x30] sm:$0xf]
          %v2449 = vld [vmem:[#allocation11 + $0x34] sm:$0xf]
          %v2450 = vld [vmem:[#allocation11 + $0x38] sm:$0xf]
          %v2451 = vld [vmem:[#allocation11 + $0x3c] sm:$0xf]
          %v2452 = vld [vmem:[#allocation11 + $0x40] sm:$0xf]
          %v2453 = vld [vmem:[#allocation11 + $0x44] sm:$0xf]
          %v2454 = vld [vmem:[#allocation11 + $0x48] sm:$0xf]
          %v2455 = vld [vmem:[#allocation11 + $0x4c] sm:$0xf]
          %v2456 = vld [vmem:[#allocation11 + $0x50] sm:$0xf]
          %v2457 = vld [vmem:[#allocation11 + $0x54] sm:$0xf]
          %v2458 = vld [vmem:[#allocation11 + $0x58] sm:$0xf]
          %v2459 = vld [vmem:[#allocation11 + $0x5c] sm:$0xf]
          %v2460 = vld [vmem:[#allocation11 + $0x60] sm:$0xf]
          %v2461 = vld [vmem:[#allocation11 + $0x64] sm:$0xf]
          %v2462 = vld [vmem:[#allocation11 + $0x68] sm:$0xf]
          %v2463 = vld [vmem:[#allocation11 + $0x6c] sm:$0xf]
          %v2464 = vld [vmem:[#allocation11 + $0x70] sm:$0xf]
          %v2465 = vld [vmem:[#allocation11 + $0x74] sm:$0xf]
          %v2466 = vld [vmem:[#allocation11 + $0x78] sm:$0xf]
          %v2467 = vld [vmem:[#allocation11 + $0x7c] sm:$0xf]
          %v2468 = vld [vmem:[#allocation11 + $0x80] sm:$0xf]
          %v2469 = vld [vmem:[#allocation11 + $0x84] sm:$0xf]
          %v2470 = vld [vmem:[#allocation11 + $0x88] sm:$0xf]
          %v2471 = vld [vmem:[#allocation11 + $0x8c] sm:$0xf]
          %v2472 = vld [vmem:[#allocation11 + $0x90] sm:$0xf]
          %v2473 = vld [vmem:[#allocation11 + $0x94] sm:$0xf]
          %v2474 = vld [vmem:[#allocation11 + $0x98] sm:$0xf]
          %v2475 = vld [vmem:[#allocation11 + $0x9c] sm:$0xf]
          %v2476 = vld [vmem:[#allocation11 + $0xa0] sm:$0xf]
          %v2477 = vld [vmem:[#allocation11 + $0xa4] sm:$0xf]
          %v2478 = vld [vmem:[#allocation11 + $0xa8] sm:$0xf]
          %v2479 = vld [vmem:[#allocation11 + $0xac] sm:$0xf]
          %v2480 = vld [vmem:[#allocation11 + $0xb0] sm:$0xf]
          %v2481 = vld [vmem:[#allocation11 + $0xb4] sm:$0xf]
          %v2482 = vld [vmem:[#allocation11 + $0xb8] sm:$0xf]
          %v2483 = vld [vmem:[#allocation11 + $0xbc] sm:$0xf]
          %v2484 = vld [vmem:[#allocation11 + $0xc0] sm:$0xf]
          %v2485 = vld [vmem:[#allocation11 + $0xc4] sm:$0xf]
          %v2486 = vld [vmem:[#allocation11 + $0xc8] sm:$0xf]
          %v2487 = vld [vmem:[#allocation11 + $0xcc] sm:$0xf]
          %v2488 = vld [vmem:[#allocation11 + $0xd0] sm:$0xf]
          %v2489 = vld [vmem:[#allocation11 + $0xd4] sm:$0xf]
          %v2490 = vld [vmem:[#allocation11 + $0xd8] sm:$0xf]
          %v2491 = vld [vmem:[#allocation11 + $0xdc] sm:$0xf]
          %v2492 = vld [vmem:[#allocation11 + $0xe0] sm:$0xf]
          %v2493 = vld [vmem:[#allocation11 + $0xe4] sm:$0xf]
          %v2494 = vld [vmem:[#allocation11 + $0xe8] sm:$0xf]
          %v2495 = vld [vmem:[#allocation11 + $0xec] sm:$0xf]
          %v2496 = vld [vmem:[#allocation11 + $0xf0] sm:$0xf]
          %v2497 = vld [vmem:[#allocation11 + $0xf4] sm:$0xf]
          %v2498 = vld [vmem:[#allocation11 + $0xf8] sm:$0xf]
          %v2499 = vld [vmem:[#allocation11 + $0xfc] sm:$0xf]
          %v2500 = vld [vmem:[#allocation12] sm:$0x1]
          %v2502 = vlaneseq
          %v2503 = vshrl.u32 %v2502, 7
          %v2504 = vsub.s32 0, %v2503
          %v2505 = vrot.slane %v2500, %v2504
          %v2571 = vunpack.c.l.b16 %v2436
          %v2572 = vunpack.c.l.b16 %v2437
          %v2573 = vunpack.c.l.b16 %v2438
          %v2574 = vunpack.c.l.b16 %v2439
          %v2575 = vunpack.c.l.b16 %v2440
          %v2576 = vunpack.c.l.b16 %v2441
          %v2577 = vunpack.c.l.b16 %v2442
          %v2578 = vunpack.c.l.b16 %v2443
          %v2579 = vunpack.c.l.b16 %v2444
          %v2580 = vunpack.c.l.b16 %v2445
          %v2581 = vunpack.c.l.b16 %v2446
          %v2582 = vunpack.c.l.b16 %v2447
          %v2583 = vunpack.c.l.b16 %v2448
          %v2584 = vunpack.c.l.b16 %v2449
          %v2585 = vunpack.c.l.b16 %v2450
          %v2586 = vunpack.c.l.b16 %v2451
          %v2587 = vunpack.c.l.b16 %v2452
          %v2588 = vunpack.c.l.b16 %v2453
          %v2589 = vunpack.c.l.b16 %v2454
          %v2590 = vunpack.c.l.b16 %v2455
          %v2591 = vunpack.c.l.b16 %v2456
          %v2592 = vunpack.c.l.b16 %v2457
          %v2593 = vunpack.c.l.b16 %v2458
          %v2594 = vunpack.c.l.b16 %v2459
          %v2595 = vunpack.c.l.b16 %v2460
          %v2596 = vunpack.c.l.b16 %v2461
          %v2597 = vunpack.c.l.b16 %v2462
          %v2598 = vunpack.c.l.b16 %v2463
          %v2599 = vunpack.c.l.b16 %v2464
          %v2600 = vunpack.c.l.b16 %v2465
          %v2601 = vunpack.c.l.b16 %v2466
          %v2602 = vunpack.c.l.b16 %v2467
          %v2603 = vunpack.c.l.b16 %v2468
          %v2604 = vunpack.c.l.b16 %v2469
          %v2605 = vunpack.c.l.b16 %v2470
          %v2606 = vunpack.c.l.b16 %v2471
          %v2607 = vunpack.c.l.b16 %v2472
          %v2608 = vunpack.c.l.b16 %v2473
          %v2609 = vunpack.c.l.b16 %v2474
          %v2610 = vunpack.c.l.b16 %v2475
          %v2611 = vunpack.c.l.b16 %v2476
          %v2612 = vunpack.c.l.b16 %v2477
          %v2613 = vunpack.c.l.b16 %v2478
          %v2614 = vunpack.c.l.b16 %v2479
          %v2615 = vunpack.c.l.b16 %v2480
          %v2616 = vunpack.c.l.b16 %v2481
          %v2617 = vunpack.c.l.b16 %v2482
          %v2618 = vunpack.c.l.b16 %v2483
          %v2619 = vunpack.c.l.b16 %v2484
          %v2620 = vunpack.c.l.b16 %v2485
          %v2621 = vunpack.c.l.b16 %v2486
          %v2622 = vunpack.c.l.b16 %v2487
          %v2623 = vunpack.c.l.b16 %v2488
          %v2624 = vunpack.c.l.b16 %v2489
          %v2625 = vunpack.c.l.b16 %v2490
          %v2626 = vunpack.c.l.b16 %v2491
          %v2627 = vunpack.c.l.b16 %v2492
          %v2628 = vunpack.c.l.b16 %v2493
          %v2629 = vunpack.c.l.b16 %v2494
          %v2630 = vunpack.c.l.b16 %v2495
          %v2631 = vunpack.c.l.b16 %v2496
          %v2632 = vunpack.c.l.b16 %v2497
          %v2633 = vunpack.c.l.b16 %v2498
          %v2634 = vunpack.c.l.b16 %v2499
          %v2635 = vpack.c.b16 %v2572, %v2571
          %v2636 = vpack.c.b16 %v2574, %v2573
          %v2637 = vpack.c.b16 %v2576, %v2575
          %v2638 = vpack.c.b16 %v2578, %v2577
          %v2639 = vpack.c.b16 %v2580, %v2579
          %v2640 = vpack.c.b16 %v2582, %v2581
          %v2641 = vpack.c.b16 %v2584, %v2583
          %v2642 = vpack.c.b16 %v2586, %v2585
          %v2643 = vpack.c.b16 %v2588, %v2587
          %v2644 = vpack.c.b16 %v2590, %v2589
          %v2645 = vpack.c.b16 %v2592, %v2591
          %v2646 = vpack.c.b16 %v2594, %v2593
          %v2647 = vpack.c.b16 %v2596, %v2595
          %v2648 = vpack.c.b16 %v2598, %v2597
          %v2649 = vpack.c.b16 %v2600, %v2599
          %v2650 = vpack.c.b16 %v2602, %v2601
          %v2651 = vpack.c.b16 %v2604, %v2603
          %v2652 = vpack.c.b16 %v2606, %v2605
          %v2653 = vpack.c.b16 %v2608, %v2607
          %v2654 = vpack.c.b16 %v2610, %v2609
          %v2655 = vpack.c.b16 %v2612, %v2611
          %v2656 = vpack.c.b16 %v2614, %v2613
          %v2657 = vpack.c.b16 %v2616, %v2615
          %v2658 = vpack.c.b16 %v2618, %v2617
          %v2659 = vpack.c.b16 %v2620, %v2619
          %v2660 = vpack.c.b16 %v2622, %v2621
          %v2661 = vpack.c.b16 %v2624, %v2623
          %v2662 = vpack.c.b16 %v2626, %v2625
          %v2663 = vpack.c.b16 %v2628, %v2627
          %v2664 = vpack.c.b16 %v2630, %v2629
          %v2665 = vpack.c.b16 %v2632, %v2631
          %v2666 = vpack.c.b16 %v2634, %v2633
          %2699 = vmatprep.subr.bf16.mxu0 0
          %2700 = vmatpush1.bf16.msra.mxu0 %v2635
          %2701 = vmatprep.subr.bf16.mxu0 0
          %2702 = vmatpush1.bf16.msra.mxu0 %v2636
          %2703 = vmatprep.subr.bf16.mxu0 0
          %2704 = vmatpush1.bf16.msra.mxu0 %v2637
          %2705 = vmatprep.subr.bf16.mxu0 0
          %2706 = vmatpush1.bf16.msra.mxu0 %v2638
          %2707 = vmatprep.subr.bf16.mxu0 0
          %2708 = vmatpush1.bf16.msra.mxu0 %v2639
          %2709 = vmatprep.subr.bf16.mxu0 0
          %2710 = vmatpush1.bf16.msra.mxu0 %v2640
          %2711 = vmatprep.subr.bf16.mxu0 0
          %2712 = vmatpush1.bf16.msra.mxu0 %v2641
          %2713 = vmatprep.subr.bf16.mxu0 0
          %2714 = vmatpush1.bf16.msra.mxu0 %v2642
          %2715 = vmatprep.subr.bf16.mxu0 0
          %2716 = vmatpush1.bf16.msra.mxu0 %v2643
          %2717 = vmatprep.subr.bf16.mxu0 0
          %2718 = vmatpush1.bf16.msra.mxu0 %v2644
          %2719 = vmatprep.subr.bf16.mxu0 0
          %2720 = vmatpush1.bf16.msra.mxu0 %v2645
          %2721 = vmatprep.subr.bf16.mxu0 0
          %2722 = vmatpush1.bf16.msra.mxu0 %v2646
          %2723 = vmatprep.subr.bf16.mxu0 0
          %2724 = vmatpush1.bf16.msra.mxu0 %v2647
          %2725 = vmatprep.subr.bf16.mxu0 0
          %2726 = vmatpush1.bf16.msra.mxu0 %v2648
          %2727 = vmatprep.subr.bf16.mxu0 0
          %2728 = vmatpush1.bf16.msra.mxu0 %v2649
          %2729 = vmatprep.subr.bf16.mxu0 0
          %2730 = vmatpush1.bf16.msra.mxu0 %v2650
          %2731 = vmatprep.mubr.bf16.mxu0 %v2433
          %2732 = vmatmul.mubr.bf16.gmra.mrb[0].mxu0 %v2432
          %v2733 = vpop.f32.mrb[0].mxu0
          %v2734 = vadd.f32 %v2505, %v2733
          %v2735 = vpop.f32.mrb[0].mxu0
          %v2736 = vpop.f32.mrb[0].mxu0
          %v2737 = vpop.f32.mrb[0].mxu0
          %2738 = vdwg.mxu0
          %2739 = vmatprep.subr.bf16.mxu0 0
          %2740 = vmatpush1.bf16.msra.mxu0 %v2651
          %2741 = vmatprep.subr.bf16.mxu0 0
          %2742 = vmatpush1.bf16.msra.mxu0 %v2652
          %2743 = vmatprep.subr.bf16.mxu0 0
          %2744 = vmatpush1.bf16.msra.mxu0 %v2653
          %2745 = vmatprep.subr.bf16.mxu0 0
          %2746 = vmatpush1.bf16.msra.mxu0 %v2654
          %2747 = vmatprep.subr.bf16.mxu0 0
          %2748 = vmatpush1.bf16.msra.mxu0 %v2655
          %2749 = vmatprep.subr.bf16.mxu0 0
          %2750 = vmatpush1.bf16.msra.mxu0 %v2656
          %2751 = vmatprep.subr.bf16.mxu0 0
          %2752 = vmatpush1.bf16.msra.mxu0 %v2657
          %2753 = vmatprep.subr.bf16.mxu0 0
          %2754 = vmatpush1.bf16.msra.mxu0 %v2658
          %2755 = vmatprep.subr.bf16.mxu0 0
          %2756 = vmatpush1.bf16.msra.mxu0 %v2659
          %2757 = vmatprep.subr.bf16.mxu0 0
          %2758 = vmatpush1.bf16.msra.mxu0 %v2660
          %2759 = vmatprep.subr.bf16.mxu0 0
          %2760 = vmatpush1.bf16.msra.mxu0 %v2661
          %2761 = vmatprep.subr.bf16.mxu0 0
          %2762 = vmatpush1.bf16.msra.mxu0 %v2662
          %2763 = vmatprep.subr.bf16.mxu0 0
          %2764 = vmatpush1.bf16.msra.mxu0 %v2663
          %2765 = vmatprep.subr.bf16.mxu0 0
          %2766 = vmatpush1.bf16.msra.mxu0 %v2664
          %2767 = vmatprep.subr.bf16.mxu0 0
          %2768 = vmatpush1.bf16.msra.mxu0 %v2665
          %2769 = vmatprep.subr.bf16.mxu0 0
          %2770 = vmatpush1.bf16.msra.mxu0 %v2666
          %2771 = vmatprep.mubr.bf16.mxu0 %v2435
          %2772 = vmatmul.mubr.bf16.gmra.mrb[0].mxu0 %v2434
          %v2773 = vpop.f32.mrb[0].mxu0
          %v2774 = vadd.f32 %v2734, %v2773
          %v2775 = vpop.f32.mrb[0].mxu0
          %v2776 = vpop.f32.mrb[0].mxu0
          %v2777 = vpop.f32.mrb[0].mxu0
          %2778 = vdwg.mxu0
          %2779 = vst [vmem:[#allocation14] sm:$0xff] %v2774
        $region76: #{tpu_custom_call.1} parent=43 // pred_fallthru
          _
        // Predicated region
        $region77: #{tpu_custom_call.1} parent=43 // pred_check
          %p2780 = pneg %p175
        $region78: #{tpu_custom_call.1} parent=43 // pred_check_branch
          %2782 = sbr.rel (%p2780) target = $region80
        $region79: #{tpu_custom_call.1} parent=43 // pred_region
          %s2784 = ssub.s32 128, 128
          %2785 = vsyncadd [#allocation5], %s2784
          %s2787 = sshll.u32 [#allocation14], 4
          %s2788 = int_to_ptr.vmem [resolvable:$true] %s2787
          %2790 = dma.vmem_to_hbm [thread:$0]  %s2788, 128, %s6, [#allocation5]
        $region80: #{tpu_custom_call.1} parent=43 // pred_fallthru
          _
        // Predicated region
        $region81: #{tpu_custom_call.1} parent=43 // pred_check
          %p2791 = pneg %p175
        $region82: #{tpu_custom_call.1} parent=43 // pred_check_branch
          %2793 = sbr.rel (%p2791) target = $region84
        $region83: #{tpu_custom_call.1} parent=43 // pred_region
          %2794 = dma.done [#allocation5], 128
        $region84: #{tpu_custom_call.1} parent=43 // pred_fallthru
          _
      $region44: #{tpu_custom_call.1} parent=5 // pred_fallthru
        _
      %p2795 = scmp.le.s32.totalorder 2, %s21
      // Predicated region
      $region85: #{tpu_custom_call.1} parent=5 // pred_check
        %p2796 = pneg %p2795
      $region86: #{tpu_custom_call.1} parent=5 // pred_check_branch
        %2798 = sbr.rel (%p2796) target = $region88
      $region87: #{tpu_custom_call.1} parent=5 // pred_region
        %s2799 = ssub.s32 %s21, 2
      $region88: #{tpu_custom_call.1} parent=5 // pred_fallthru
        _
    $region6: #{tpu_custom_call.1} parent=1 // loop_footer
      %s25 = sadd.s32 1, %s21
    $region7: #{tpu_custom_call.1} parent=1 // loop_footer_branch
      %20 = sbr.rel target = $region3
    $region8: #{tpu_custom_call.1} parent=1 // loop_exit
      _
    %2800 = vsyncpa [#allocation4], 1
    %s2801 = scalar_lea.sflag [#allocation4], 1
    %2802 = vsyncpa %s2801, 1
    %2803 = vsyncpa [#allocation7], 1
    %s2804 = scalar_lea.sflag [#allocation7], 1
    %2805 = vsyncpa %s2804, 1
    %2806 = vsyncpa [#allocation10], 1
    %2807 = vsyncpa [#allocation13], 1
    %2808 = vsyncpa [#allocation5], 1
    %s2809 = scalar_lea.sflag [#allocation5], 1
    %2810 = vsyncpa %s2809, 1

</llo_original>
